<compile_context>
chip_gen: v6e
topology: v6e:2x2x1
jax: 0.10.0
libtpu: 0.0.40
codegen_flags: <defaults>
</compile_context>

<pallas_src>
import math
import jax
import jax.numpy as jnp
from jax.experimental import pallas as pl
from jax.experimental.pallas import tpu as pltpu

LN_EPS = 1e-5  # PyTorch nn.LayerNorm default eps

# MXU operand dtype (bf16-native on v5e/v6e/v7x); accumulation stays f32.
MATMUL_DTYPE = jnp.bfloat16
# Attention-map output dtype; set to jnp.bfloat16 to halve HBM writeback when S
# is large (kept f32 here for tight parity on the tiny demo maps).
ATTN_MAP_DTYPE = jnp.float32


def _round_up(x, m):
    return ((x + m - 1) // m) * m


def _vmem_limit_bytes():
    """Per-generation VMEM budget: ~3/4 of physical, capped at 100 MiB
    (v5e/v6e -> ~96 MiB, v7x -> 48 MiB).  Conservative fallback if the query
    is unavailable."""
    try:
        cap = pltpu.get_tpu_info().vmem_capacity_bytes
        return int(min(cap * 3 // 4, 100 * 1024 * 1024))
    except Exception:
        return 48 * 1024 * 1024


_VMEM_LIMIT = _vmem_limit_bytes()


def _layer_norm(x, gamma, beta):
    mean = jnp.mean(x, axis=-1, keepdims=True)
    var = jnp.mean((x - mean) ** 2, axis=-1, keepdims=True)
    return (x - mean) * jax.lax.rsqrt(var + LN_EPS) * gamma + beta


def _mm(a, b):
    """MXU matmul: operands cast to MATMUL_DTYPE, f32 accumulation."""
    return jnp.dot(a.astype(MATMUL_DTYPE), b.astype(MATMUL_DTYPE),
                   preferred_element_type=jnp.float32)


def _mm_t(a, b):
    """a @ b.T (contract last dims) without materializing the transpose."""
    return jax.lax.dot_general(
        a.astype(MATMUL_DTYPE), b.astype(MATMUL_DTYPE),
        (((1,), (1,)), ((), ())), preferred_element_type=jnp.float32)


def transformer_layer_kernel(x_in_ref,
                             wqkv_ref, bqkv_ref, wo_ref, bo_ref,
                             g1_ref, be1_ref, g2_ref, be2_ref,
                             w1_ref, b1_ref, w2_ref, b2_ref,
                             attn_ref, x_out_ref,
                             x_scr):
    """grid = (B, L): b is 'parallel' (megacore-shardable), l is the sequential
    layer loop.  The per-batch residual stream lives in the VMEM scratch `x_scr`
    across layers (no HBM round trip between layers); layer l+1 weights are
    prefetched by the BlockSpec pipeline while layer l computes."""
    l = pl.program_id(1)
    S, D = x_scr.shape
    S_pad = attn_ref.shape[-1]
    scale = 1.0 / math.sqrt(D)

    @pl.when(l == 0)
    def _init():
        x_scr[...] = x_in_ref[...]

    x = x_scr[...]                                          # (S, D) f32 residual

    # ---- fused QKV projection: one (D, 3D) matmul ----
    qkv = _mm(x, wqkv_ref[...]) + bqkv_ref[...]             # (S, 3D) f32
    q = qkv[:, 0:D] * scale            # fold 1/sqrt(d_model) into q (S*D work)
    k = qkv[:, D:2 * D]
    v = qkv[:, 2 * D:3 * D]

    # ---- attention (softmax over keys), all softmax math in f32 ----
    if S_pad > S:
        # Lane-dense path (only taken when S >= 128): pad keys/values along the
        # seq axis and bias the pad columns to -inf BEFORE softmax, so the pad
        # probabilities are exactly zero and no post-softmax concatenate is made.
        pad = S_pad - S
        k = jnp.concatenate([k, jnp.zeros((pad, D), k.dtype)], axis=0)
        v = jnp.concatenate([v, jnp.zeros((pad, D), v.dtype)], axis=0)
        col = jax.lax.broadcasted_iota(jnp.int32, (S, S_pad), 1)
        pad_bias = jnp.where(col >= S, -1e30, 0.0).astype(jnp.float32)
        scores = _mm_t(q, k) + pad_bias                     # (S, S_pad) f32
    else:
        scores = _mm_t(q, k)                                # (S, S) f32

    scores = scores - jnp.max(scores, axis=-1, keepdims=True)
    e = jnp.exp(scores)
    attn = e / jnp.sum(e, axis=-1, keepdims=True)           # exact normalization
    attn_ref[...] = attn.astype(attn_ref.dtype)             # per-layer attn map

    attn_out = _mm(attn, v)                                 # (S, D) f32
    proj = _mm(attn_out, wo_ref[...]) + bo_ref[...]
    # dropout(p=0.1) -> identity (eval-mode semantics)
    x1 = _layer_norm(x + proj, g1_ref[...], be1_ref[...])

    # ---- FFN ----
    h = jnp.maximum(_mm(x1, w1_ref[...]) + b1_ref[...], 0.0)
    ffn = _mm(h, w2_ref[...]) + b2_ref[...]
    x2 = _layer_norm(x1 + ffn, g2_ref[...], be2_ref[...])

    x_scr[...] = x2                                         # carry to next layer
    x_out_ref[...] = x2                                     # final value flushed
                                                            # when b advances


def classifier_head_kernel(x_ref, wout_ref, bout_ref, logp_ref):
    """Output projection + log_softmax; separate (tiny) call so the (B,S,C)
    block is not VMEM-resident during the layer loop."""
    logits = _mm(x_ref[...], wout_ref[...]) + bout_ref[...]     # (S, C) f32
    z = logits - jnp.max(logits, axis=-1, keepdims=True)
    logp_ref[...] = z - jnp.log(jnp.sum(jnp.exp(z), axis=-1, keepdims=True))


@jax.jit
def transformer_forward(indices, params):
    if indices.ndim == 1:
        indices = indices[None, :]
    B, S = indices.shape

    # Embedding gather + positional encoding (plain-JAX glue).
    x = (params["embedding"][indices]
         + params["pe"][None, :S, :]).astype(jnp.float32)        # (B, S, D)
    D = x.shape[-1]
    st = params["layers"]
    L = st["wqkv"].shape[0]
    C = params["wout"].shape[-1]
    # Only pad the attention-map lane dim when S is already >= 128 (padding a
    # tiny S would be pure HBM write amplification).
    S_pad = S if S < 128 else _round_up(S, 128)

    def _layer_spec(shape):
        rest = tuple(shape[1:])
        return pl.BlockSpec((None,) + rest,
                            lambda b, l, _n=len(rest): (l,) + (0,) * _n)

    in_specs = [
        pl.BlockSpec((None, S, D), lambda b, l: (b, 0, 0)),      # x (per batch)
        _layer_spec(st["wqkv"].shape), _layer_spec(st["bqkv"].shape),
        _layer_spec(st["wo"].shape), _layer_spec(st["bo"].shape),
        _layer_spec(st["g1"].shape), _layer_spec(st["be1"].shape),
        _layer_spec(st["g2"].shape), _layer_spec(st["be2"].shape),
        _layer_spec(st["w1"].shape), _layer_spec(st["b1"].shape),
        _layer_spec(st["w2"].shape), _layer_spec(st["b2"].shape),
    ]
    out_specs = (
        pl.BlockSpec((None, None, S, S_pad), lambda b, l: (l, b, 0, 0)),  # attn
        pl.BlockSpec((None, S, D), lambda b, l: (b, 0, 0)),               # x_final
    )

    attn_pad, x_final = pl.pallas_call(
        transformer_layer_kernel,
        out_shape=(jax.ShapeDtypeStruct((L, B, S, S_pad), ATTN_MAP_DTYPE),
                   jax.ShapeDtypeStruct((B, S, D), jnp.float32)),
        grid_spec=pltpu.PrefetchScalarGridSpec(
            num_scalar_prefetch=0,
            grid=(B, L),
            in_specs=in_specs,
            out_specs=out_specs,
            scratch_shapes=[pltpu.VMEM((S, D), jnp.float32)]),
        compiler_params=pltpu.CompilerParams(
            dimension_semantics=("parallel", "arbitrary"),
            vmem_limit_bytes=_VMEM_LIMIT),
    )(x,
      st["wqkv"].astype(MATMUL_DTYPE), st["bqkv"],
      st["wo"].astype(MATMUL_DTYPE), st["bo"],
      st["g1"], st["be1"], st["g2"], st["be2"],
      st["w1"].astype(MATMUL_DTYPE), st["b1"],
      st["w2"].astype(MATMUL_DTYPE), st["b2"])

    # Classifier head in its own pallas_call (keeps the log-prob block out of
    # VMEM during the layer loop; no class padding needed for small C).
    log_probs = pl.pallas_call(
        classifier_head_kernel,
        out_shape=jax.ShapeDtypeStruct((B, S, C), jnp.float32),
        grid_spec=pltpu.PrefetchScalarGridSpec(
            num_scalar_prefetch=0,
            grid=(B,),
            in_specs=[pl.BlockSpec((None, S, D), lambda b: (b, 0, 0)),
                      pl.BlockSpec((D, C), lambda b: (0, 0)),
                      pl.BlockSpec((1, C), lambda b: (0, 0))],
            out_specs=pl.BlockSpec((None, S, C), lambda b: (b, 0, 0))),
        compiler_params=pltpu.CompilerParams(
            dimension_semantics=("parallel",),
            vmem_limit_bytes=_VMEM_LIMIT),
    )(x_final, params["wout"].astype(MATMUL_DTYPE), params["bout"])

    attention_maps = [attn_pad[l, :, :, :S].astype(jnp.float32) for l in range(L)]
    return log_probs, attention_maps


def make_positional_encoding(d_model, num_positions):
    position = jnp.arange(num_positions, dtype=jnp.float32)[:, None]
    div_term = jnp.exp(jnp.arange(0, d_model, 2, dtype=jnp.float32)
                       * (-math.log(10000.0) / d_model))
    pe = jnp.zeros((num_positions, d_model), dtype=jnp.float32)
    pe = pe.at[:, 0::2].set(jnp.sin(position * div_term))
    pe = pe.at[:, 1::2].set(jnp.cos(position * div_term))
    return pe


def init_params(key, vocab_size, num_positions, d_model, d_internal,
                num_classes, num_layers):
    keys = jax.random.split(key, 2 + num_layers)
    params = {
        "embedding": jax.random.normal(keys[0], (vocab_size, d_model), jnp.float32),
        "pe": make_positional_encoding(d_model, num_positions),
    }
    ko = jax.random.split(keys[1], 2)
    s_out = 1.0 / math.sqrt(d_model)
    params["wout"] = jax.random.uniform(ko[0], (d_model, num_classes),
                                        jnp.float32, -s_out, s_out)
    params["bout"] = jax.random.uniform(ko[1], (1, num_classes),
                                        jnp.float32, -s_out, s_out)

    s_d = 1.0 / math.sqrt(d_model)
    s_i = 1.0 / math.sqrt(d_internal)
    per_layer = []
    for l in range(num_layers):
        lk = jax.random.split(keys[2 + l], 12)
        wq = jax.random.uniform(lk[0], (d_model, d_model), jnp.float32, -s_d, s_d)
        bq = jax.random.uniform(lk[1], (1, d_model), jnp.float32, -s_d, s_d)
        wk = jax.random.uniform(lk[2], (d_model, d_model), jnp.float32, -s_d, s_d)
        bk = jax.random.uniform(lk[3], (1, d_model), jnp.float32, -s_d, s_d)
        wv = jax.random.uniform(lk[4], (d_model, d_model), jnp.float32, -s_d, s_d)
        bv = jax.random.uniform(lk[5], (1, d_model), jnp.float32, -s_d, s_d)
        lp = {
            "wqkv": jnp.concatenate([wq, wk, wv], axis=1),     # (D, 3D) packed
            "bqkv": jnp.concatenate([bq, bk, bv], axis=1),     # (1, 3D) packed
            "wo": jax.random.uniform(lk[6], (d_model, d_model), jnp.float32, -s_d, s_d),
            "bo": jax.random.uniform(lk[7], (1, d_model), jnp.float32, -s_d, s_d),
            "g1": jnp.ones((1, d_model), jnp.float32),
            "be1": jnp.zeros((1, d_model), jnp.float32),
            "g2": jnp.ones((1, d_model), jnp.float32),
            "be2": jnp.zeros((1, d_model), jnp.float32),
            "w1": jax.random.uniform(lk[8], (d_model, d_internal), jnp.float32, -s_d, s_d),
            "b1": jax.random.uniform(lk[9], (1, d_internal), jnp.float32, -s_d, s_d),
            "w2": jax.random.uniform(lk[10], (d_internal, d_model), jnp.float32, -s_i, s_i),
            "b2": jax.random.uniform(lk[11], (1, d_model), jnp.float32, -s_i, s_i),
        }
        per_layer.append(lp)
    # Stack per-layer weights along a leading L axis for the fused-layer grid.
    params["layers"] = {k: jnp.stack([lp[k] for lp in per_layer], axis=0)
                        for k in per_layer[0]}
    return params


def reference_forward(indices, params, matmul_dtype=jnp.float32):
    """Pure-JAX reference mirroring the PyTorch module.  With matmul_dtype=f32
    this is exact PyTorch-parity math; passing MATMUL_DTYPE mirrors the kernel's
    MXU operand precision so the comparison isolates kernel bugs from bf16
    rounding."""
    if indices.ndim == 1:
        indices = indices[None, :]
    x = params["embedding"][indices] + params["pe"][None, :indices.shape[1], :]
    st = params["layers"]
    L = st["wqkv"].shape[0]
    B, S, D = x.shape
    scale = 1.0 / math.sqrt(D)

    def mm(a, b):
        return jnp.dot(a.astype(matmul_dtype), b.astype(matmul_dtype),
                       preferred_element_type=jnp.float32)

    attn_maps = []
    for l in range(L):
        x2d = x.reshape(B * S, D)
        qkv = (mm(x2d, st["wqkv"][l]) + st["bqkv"][l]).reshape(B, S, 3 * D)
        q = qkv[..., 0:D] * scale
        k = qkv[..., D:2 * D]
        v = qkv[..., 2 * D:3 * D]
        scores = jnp.einsum('bqd,bkd->bqk',
                            q.astype(matmul_dtype), k.astype(matmul_dtype),
                            preferred_element_type=jnp.float32)
        attn = jax.nn.softmax(scores, axis=-1)
        attn_maps.append(attn)
        attn_out = jnp.einsum('bqk,bkd->bqd',
                              attn.astype(matmul_dtype), v.astype(matmul_dtype),
                              preferred_element_type=jnp.float32)
        proj = mm(attn_out.reshape(B * S, D), st["wo"][l]) + st["bo"][l]
        x1 = _layer_norm(x2d + proj, st["g1"][l], st["be1"][l])
        h = jnp.maximum(mm(x1, st["w1"][l]) + st["b1"][l], 0.0)
        ffn = mm(h, st["w2"][l]) + st["b2"][l]
        x = _layer_norm(x1 + ffn, st["g2"][l], st["be2"][l]).reshape(B, S, D)

    logits = (mm(x.reshape(B * S, D), params["wout"])
              + params["bout"]).reshape(B, S, -1)
    return jax.nn.log_softmax(logits, axis=-1), attn_maps


if __name__ == "__main__":
    vocab_size, num_positions = 20, 100
    d_model, d_internal = 32, 64
    num_classes, num_layers = 8, 2
    B, S = 2, 8

    key = jax.random.PRNGKey(0)
    k_param, k_idx = jax.random.split(key)
    params = init_params(k_param, vocab_size, num_positions, d_model,
                         d_internal, num_classes, num_layers)
    indices = jax.random.randint(k_idx, (B, S), 0, vocab_size, dtype=jnp.int32)

    log_probs, attn_maps = transformer_forward(indices, params)
    jax.block_until_ready(log_probs)
    for a in attn_maps:
        jax.block_until_ready(a)

    # Shape / sanity checks.
    assert log_probs.shape == (B, S, num_classes)
    assert all(a.shape == (B, S, S) for a in attn_maps)
    assert bool(jnp.allclose(jnp.sum(jnp.exp(log_probs), axis=-1), 1.0, atol=1e-4))

    # Parity vs a reference that mirrors the kernel's MXU operand dtype (bf16);
    # with MATMUL_DTYPE = jnp.float32 the same check passes at ~1e-5.
    ref_lp, ref_attn = reference_forward(indices, params, matmul_dtype=MATMUL_DTYPE)
    assert bool(jnp.allclose(log_probs, ref_lp, atol=2e-2, rtol=2e-2))
    for a, r in zip(attn_maps, ref_attn):
        assert bool(jnp.allclose(a, r, atol=2e-2))

    print("KERNEL_OK")
</pallas_src>

<mosaic_0001>
module attributes {stable_mosaic.version = 11 : i64} {
  func.func @classifier_head_kernel(%arg0: i32, %arg1: memref<1x8x32xf32, #tpu.memory_space<vmem>>, %arg2: memref<32x8xbf16, #tpu.memory_space<vmem>>, %arg3: memref<1x8xf32, #tpu.memory_space<vmem>>, %arg4: memref<1x8x8xf32, #tpu.memory_space<vmem>>) attributes {dimension_semantics = [#tpu.dimension_semantics<parallel>], iteration_bounds = array<i64: 2>, scalar_prefetch = 0 : i64, scratch_operands = 0 : i64, tpu.core_type = #tpu.core_type<tc>, window_params = [{transform_indices = @transform_0, window_bounds = array<i64: 1, 8, 32>}, {pipeline_mode = #tpu.pipeline_mode<synchronous>, transform_indices = @transform_1, window_bounds = array<i64: 32, 8>}, {pipeline_mode = #tpu.pipeline_mode<synchronous>, transform_indices = @transform_2, window_bounds = array<i64: 1, 8>}, {transform_indices = @transform_3, window_bounds = array<i64: 1, 8, 8>}]} {
    %c0 = arith.constant 0 : index
    %c0_0 = arith.constant 0 : index
    %c0_1 = arith.constant 0 : index
    %0 = vector.load %arg1[%c0, %c0_0, %c0_1] : memref<1x8x32xf32, #tpu.memory_space<vmem>>, vector<1x8x32xf32>
    %1 = vector.shape_cast %0 : vector<1x8x32xf32> to vector<8x32xf32>
    %c0_2 = arith.constant 0 : index
    %c0_3 = arith.constant 0 : index
    %2 = vector.load %arg2[%c0_2, %c0_3] : memref<32x8xbf16, #tpu.memory_space<vmem>>, vector<32x8xbf16>
    %3 = arith.truncf %1 : vector<8x32xf32> to vector<8x32xbf16>
    %cst = arith.constant dense<0.000000e+00> : vector<8x8xf32>
    %4 = tpu.matmul %3, %2, %cst {dimension_numbers = #tpu.dot_dimension_numbers<[1], [0], [0], [1], [0, 0, 1, 1], [], []>} : vector<8x32xbf16>, vector<32x8xbf16>, vector<8x8xf32> -> vector<8x8xf32>
    %c0_4 = arith.constant 0 : index
    %c0_5 = arith.constant 0 : index
    %5 = vector.load %arg3[%c0_4, %c0_5] : memref<1x8xf32, #tpu.memory_space<vmem>>, vector<1x8xf32>
    %6 = vector.broadcast %5 : vector<1x8xf32> to vector<8x8xf32>
    %7 = arith.addf %4, %6 : vector<8x8xf32>
    %cst_6 = arith.constant dense<0xFF800000> : vector<8xf32>
    %8 = vector.multi_reduction <maximumf>, %7, %cst_6 [1] : vector<8x8xf32> to vector<8xf32>
    %9 = vector.shape_cast %8 : vector<8xf32> to vector<8x1xf32>
    %10 = vector.broadcast %9 : vector<8x1xf32> to vector<8x8xf32>
    %11 = arith.subf %7, %10 : vector<8x8xf32>
    %12 = math.exp %11 : vector<8x8xf32>
    %cst_7 = arith.constant dense<0.000000e+00> : vector<8xf32>
    %13 = vector.multi_reduction <add>, %12, %cst_7 [1] : vector<8x8xf32> to vector<8xf32>
    %14 = vector.shape_cast %13 : vector<8xf32> to vector<8x1xf32>
    %15 = math.log %14 : vector<8x1xf32>
    %16 = vector.broadcast %15 : vector<8x1xf32> to vector<8x8xf32>
    %17 = arith.subf %11, %16 : vector<8x8xf32>
    %c0_8 = arith.constant 0 : index
    %c0_9 = arith.constant 0 : index
    %c0_10 = arith.constant 0 : index
    %18 = vector.load %arg4[%c0_8, %c0_9, %c0_10] : memref<1x8x8xf32, #tpu.memory_space<vmem>>, vector<1x8x8xf32>
    %19 = vector.shape_cast %18 : vector<1x8x8xf32> to vector<8x8xf32>
    %20 = vector.shape_cast %17 : vector<8x8xf32> to vector<1x8x8xf32>
    tpu.vector_store %arg4[%c0_8, %c0_9, %c0_10], %20 {strides = array<i32>} : memref<1x8x8xf32, #tpu.memory_space<vmem>>, vector<1x8x8xf32>,
    return
  }
  func.func @transform_0(%arg0: i32) -> (i32, i32, i32) {
    %c0_i32 = arith.constant 0 : i32
    %c0_i32_0 = arith.constant 0 : i32
    %c0_i32_1 = arith.constant 0 : i32
    return %arg0, %c0_i32, %c0_i32_0 : i32, i32, i32
  }
  func.func @transform_1(%arg0: i32) -> (i32, i32) {
    %c0_i32 = arith.constant 0 : i32
    %c0_i32_0 = arith.constant 0 : i32
    %c0_i32_1 = arith.constant 0 : i32
    return %c0_i32, %c0_i32_0 : i32, i32
  }
  func.func @transform_2(%arg0: i32) -> (i32, i32) {
    %c0_i32 = arith.constant 0 : i32
    %c0_i32_0 = arith.constant 0 : i32
    %c0_i32_1 = arith.constant 0 : i32
    return %c0_i32, %c0_i32_0 : i32, i32
  }
  func.func @transform_3(%arg0: i32) -> (i32, i32, i32) {
    %c0_i32 = arith.constant 0 : i32
    %c0_i32_0 = arith.constant 0 : i32
    %c0_i32_1 = arith.constant 0 : i32
    return %arg0, %c0_i32, %c0_i32_0 : i32, i32, i32
  }
}

module attributes {stable_mosaic.version = 11 : i64} {
  func.func @transformer_layer_kernel(%arg0: i32, %arg1: i32, %arg2: memref<1x8x32xf32, #tpu.memory_space<vmem>>, %arg3: memref<1x32x96xbf16, #tpu.memory_space<vmem>>, %arg4: memref<1x1x96xf32, #tpu.memory_space<vmem>>, %arg5: memref<1x32x32xbf16, #tpu.memory_space<vmem>>, %arg6: memref<1x1x32xf32, #tpu.memory_space<vmem>>, %arg7: memref<1x1x32xf32, #tpu.memory_space<vmem>>, %arg8: memref<1x1x32xf32, #tpu.memory_space<vmem>>, %arg9: memref<1x1x32xf32, #tpu.memory_space<vmem>>, %arg10: memref<1x1x32xf32, #tpu.memory_space<vmem>>, %arg11: memref<1x32x64xbf16, #tpu.memory_space<vmem>>, %arg12: memref<1x1x64xf32, #tpu.memory_space<vmem>>, %arg13: memref<1x64x32xbf16, #tpu.memory_space<vmem>>, %arg14: memref<1x1x32xf32, #tpu.memory_space<vmem>>, %arg15: memref<1x1x8x8xf32, #tpu.memory_space<vmem>>, %arg16: memref<1x8x32xf32, #tpu.memory_space<vmem>>, %arg17: memref<8x32xf32, #tpu.memory_space<vmem>>) attributes {dimension_semantics = [#tpu.dimension_semantics<parallel>, #tpu.dimension_semantics<arbitrary>], iteration_bounds = array<i64: 2, 2>, scalar_prefetch = 0 : i64, scratch_operands = 1 : i64, tpu.core_type = #tpu.core_type<tc>, window_params = [{transform_indices = @transform_0, window_bounds = array<i64: 1, 8, 32>}, {transform_indices = @transform_1, window_bounds = array<i64: 1, 32, 96>}, {transform_indices = @transform_2, window_bounds = array<i64: 1, 1, 96>}, {transform_indices = @transform_3, window_bounds = array<i64: 1, 32, 32>}, {transform_indices = @transform_4, window_bounds = array<i64: 1, 1, 32>}, {transform_indices = @transform_5, window_bounds = array<i64: 1, 1, 32>}, {transform_indices = @transform_6, window_bounds = array<i64: 1, 1, 32>}, {transform_indices = @transform_7, window_bounds = array<i64: 1, 1, 32>}, {transform_indices = @transform_8, window_bounds = array<i64: 1, 1, 32>}, {transform_indices = @transform_9, window_bounds = array<i64: 1, 32, 64>}, {transform_indices = @transform_10, window_bounds = array<i64: 1, 1, 64>}, {transform_indices = @transform_11, window_bounds = array<i64: 1, 64, 32>}, {transform_indices = @transform_12, window_bounds = array<i64: 1, 1, 32>}, {transform_indices = @transform_13, window_bounds = array<i64: 1, 1, 8, 8>}, {transform_indices = @transform_14, window_bounds = array<i64: 1, 8, 32>}]} {
    %c0_i32 = arith.constant 0 : i32
    %0 = arith.cmpi eq, %arg1, %c0_i32 : i32
    %1 = arith.extui %0 : i1 to i32
    %c0_i32_0 = arith.constant 0 : i32
    %2 = arith.cmpi ne, %1, %c0_i32_0 : i32
    scf.if %2 {
      %c0_66 = arith.constant 0 : index
      %c0_67 = arith.constant 0 : index
      %c0_68 = arith.constant 0 : index
      %119 = vector.load %arg2[%c0_66, %c0_67, %c0_68] : memref<1x8x32xf32, #tpu.memory_space<vmem>>, vector<1x8x32xf32>
      %120 = vector.shape_cast %119 : vector<1x8x32xf32> to vector<8x32xf32>
      %c0_69 = arith.constant 0 : index
      %c0_70 = arith.constant 0 : index
      %121 = vector.load %arg17[%c0_69, %c0_70] : memref<8x32xf32, #tpu.memory_space<vmem>>, vector<8x32xf32>
      tpu.vector_store %arg17[%c0_69, %c0_70], %120 {strides = array<i32>} : memref<8x32xf32, #tpu.memory_space<vmem>>, vector<8x32xf32>,
    } else {
    }
    %c0 = arith.constant 0 : index
    %c0_1 = arith.constant 0 : index
    %3 = vector.load %arg17[%c0, %c0_1] : memref<8x32xf32, #tpu.memory_space<vmem>>, vector<8x32xf32>
    %c0_2 = arith.constant 0 : index
    %c0_3 = arith.constant 0 : index
    %c0_4 = arith.constant 0 : index
    %4 = vector.load %arg3[%c0_2, %c0_3, %c0_4] : memref<1x32x96xbf16, #tpu.memory_space<vmem>>, vector<1x32x96xbf16>
    %5 = vector.shape_cast %4 : vector<1x32x96xbf16> to vector<32x96xbf16>
    %6 = arith.truncf %3 : vector<8x32xf32> to vector<8x32xbf16>
    %cst = arith.constant dense<0.000000e+00> : vector<8x96xf32>
    %7 = tpu.matmul %6, %5, %cst {dimension_numbers = #tpu.dot_dimension_numbers<[1], [0], [0], [1], [0, 0, 1, 1], [], []>} : vector<8x32xbf16>, vector<32x96xbf16>, vector<8x96xf32> -> vector<8x96xf32>
    %c0_5 = arith.constant 0 : index
    %c0_6 = arith.constant 0 : index
    %c0_7 = arith.constant 0 : index
    %8 = vector.load %arg4[%c0_5, %c0_6, %c0_7] : memref<1x1x96xf32, #tpu.memory_space<vmem>>, vector<1x1x96xf32>
    %9 = vector.shape_cast %8 : vector<1x1x96xf32> to vector<1x96xf32>
    %10 = vector.broadcast %9 : vector<1x96xf32> to vector<8x96xf32>
    %11 = arith.addf %7, %10 : vector<8x96xf32>
    %12 = vector.extract_strided_slice %11 {offsets = [0, 0], sizes = [8, 32], strides = [1, 1]} : vector<8x96xf32> to vector<8x32xf32>
    %cst_8 = arith.constant 0.176776692 : f32
    %13 = vector.broadcast %cst_8 : f32 to vector<8x32xf32>
    %14 = arith.mulf %12, %13 : vector<8x32xf32>
    %15 = vector.extract_strided_slice %11 {offsets = [0, 32], sizes = [8, 32], strides = [1, 1]} : vector<8x96xf32> to vector<8x32xf32>
    %16 = vector.extract_strided_slice %11 {offsets = [0, 64], sizes = [8, 32], strides = [1, 1]} : vector<8x96xf32> to vector<8x32xf32>
    %17 = arith.truncf %14 : vector<8x32xf32> to vector<8x32xbf16>
    %18 = arith.truncf %15 : vector<8x32xf32> to vector<8x32xbf16>
    %cst_9 = arith.constant dense<0.000000e+00> : vector<8x8xf32>
    %19 = tpu.matmul %17, %18, %cst_9 {dimension_numbers = #tpu.dot_dimension_numbers<[1], [1], [0], [0], [0, 0, 1, 0], [], []>} : vector<8x32xbf16>, vector<8x32xbf16>, vector<8x8xf32> -> vector<8x8xf32>
    %cst_10 = arith.constant dense<0xFF800000> : vector<8xf32>
    %20 = vector.multi_reduction <maximumf>, %19, %cst_10 [1] : vector<8x8xf32> to vector<8xf32>
    %21 = vector.shape_cast %20 : vector<8xf32> to vector<8x1xf32>
    %22 = vector.broadcast %21 : vector<8x1xf32> to vector<8x8xf32>
    %23 = arith.subf %19, %22 : vector<8x8xf32>
    %24 = math.exp %23 : vector<8x8xf32>
    %cst_11 = arith.constant dense<0.000000e+00> : vector<8xf32>
    %25 = vector.multi_reduction <add>, %24, %cst_11 [1] : vector<8x8xf32> to vector<8xf32>
    %26 = vector.shape_cast %25 : vector<8xf32> to vector<8x1xf32>
    %27 = vector.broadcast %26 : vector<8x1xf32> to vector<8x8xf32>
    %28 = arith.divf %24, %27 : vector<8x8xf32>
    %c0_12 = arith.constant 0 : index
    %c0_13 = arith.constant 0 : index
    %c0_14 = arith.constant 0 : index
    %c0_15 = arith.constant 0 : index
    %29 = vector.load %arg15[%c0_12, %c0_13, %c0_14, %c0_15] : memref<1x1x8x8xf32, #tpu.memory_space<vmem>>, vector<1x1x8x8xf32>
    %30 = vector.shape_cast %29 : vector<1x1x8x8xf32> to vector<8x8xf32>
    %31 = vector.shape_cast %28 : vector<8x8xf32> to vector<1x1x8x8xf32>
    tpu.vector_store %arg15[%c0_12, %c0_13, %c0_14, %c0_15], %31 {strides = array<i32>} : memref<1x1x8x8xf32, #tpu.memory_space<vmem>>, vector<1x1x8x8xf32>,
    %32 = arith.truncf %28 : vector<8x8xf32> to vector<8x8xbf16>
    %33 = arith.truncf %16 : vector<8x32xf32> to vector<8x32xbf16>
    %cst_16 = arith.constant dense<0.000000e+00> : vector<8x32xf32>
    %34 = tpu.matmul %32, %33, %cst_16 {dimension_numbers = #tpu.dot_dimension_numbers<[1], [0], [0], [1], [0, 0, 1, 1], [], []>} : vector<8x8xbf16>, vector<8x32xbf16>, vector<8x32xf32> -> vector<8x32xf32>
    %c0_17 = arith.constant 0 : index
    %c0_18 = arith.constant 0 : index
    %c0_19 = arith.constant 0 : index
    %35 = vector.load %arg5[%c0_17, %c0_18, %c0_19] : memref<1x32x32xbf16, #tpu.memory_space<vmem>>, vector<1x32x32xbf16>
    %36 = vector.shape_cast %35 : vector<1x32x32xbf16> to vector<32x32xbf16>
    %37 = arith.truncf %34 : vector<8x32xf32> to vector<8x32xbf16>
    %cst_20 = arith.constant dense<0.000000e+00> : vector<8x32xf32>
    %38 = tpu.matmul %37, %36, %cst_20 {dimension_numbers = #tpu.dot_dimension_numbers<[1], [0], [0], [1], [0, 0, 1, 1], [], []>} : vector<8x32xbf16>, vector<32x32xbf16>, vector<8x32xf32> -> vector<8x32xf32>
    %c0_21 = arith.constant 0 : index
    %c0_22 = arith.constant 0 : index
    %c0_23 = arith.constant 0 : index
    %39 = vector.load %arg6[%c0_21, %c0_22, %c0_23] : memref<1x1x32xf32, #tpu.memory_space<vmem>>, vector<1x1x32xf32>
    %40 = vector.shape_cast %39 : vector<1x1x32xf32> to vector<1x32xf32>
    %41 = vector.broadcast %40 : vector<1x32xf32> to vector<8x32xf32>
    %42 = arith.addf %38, %41 : vector<8x32xf32>
    %43 = arith.addf %3, %42 : vector<8x32xf32>
    %c0_24 = arith.constant 0 : index
    %c0_25 = arith.constant 0 : index
    %c0_26 = arith.constant 0 : index
    %44 = vector.load %arg7[%c0_24, %c0_25, %c0_26] : memref<1x1x32xf32, #tpu.memory_space<vmem>>, vector<1x1x32xf32>
    %45 = vector.shape_cast %44 : vector<1x1x32xf32> to vector<1x32xf32>
    %c0_27 = arith.constant 0 : index
    %c0_28 = arith.constant 0 : index
    %c0_29 = arith.constant 0 : index
    %46 = vector.load %arg8[%c0_27, %c0_28, %c0_29] : memref<1x1x32xf32, #tpu.memory_space<vmem>>, vector<1x1x32xf32>
    %47 = vector.shape_cast %46 : vector<1x1x32xf32> to vector<1x32xf32>
    %cst_30 = arith.constant dense<0.000000e+00> : vector<8xf32>
    %48 = vector.multi_reduction <add>, %43, %cst_30 [1] : vector<8x32xf32> to vector<8xf32>
    %49 = vector.shape_cast %48 : vector<8xf32> to vector<8x1xf32>
    %cst_31 = arith.constant 3.200000e+01 : f32
    %50 = vector.broadcast %cst_31 : f32 to vector<8x1xf32>
    %51 = arith.divf %49, %50 : vector<8x1xf32>
    %52 = vector.broadcast %51 : vector<8x1xf32> to vector<8x32xf32>
    %53 = arith.subf %43, %52 : vector<8x32xf32>
    %54 = arith.mulf %53, %53 : vector<8x32xf32>
    %cst_32 = arith.constant dense<0.000000e+00> : vector<8xf32>
    %55 = vector.multi_reduction <add>, %54, %cst_32 [1] : vector<8x32xf32> to vector<8xf32>
    %56 = vector.shape_cast %55 : vector<8xf32> to vector<8x1xf32>
    %cst_33 = arith.constant 3.200000e+01 : f32
    %57 = vector.broadcast %cst_33 : f32 to vector<8x1xf32>
    %58 = arith.divf %56, %57 : vector<8x1xf32>
    %59 = vector.broadcast %51 : vector<8x1xf32> to vector<8x32xf32>
    %60 = arith.subf %43, %59 : vector<8x32xf32>
    %cst_34 = arith.constant 9.99999974E-6 : f32
    %61 = vector.broadcast %cst_34 : f32 to vector<8x1xf32>
    %62 = arith.addf %58, %61 : vector<8x1xf32>
    %63 = math.rsqrt %62 : vector<8x1xf32>
    %64 = vector.broadcast %63 : vector<8x1xf32> to vector<8x32xf32>
    %65 = arith.mulf %60, %64 : vector<8x32xf32>
    %66 = vector.broadcast %45 : vector<1x32xf32> to vector<8x32xf32>
    %67 = arith.mulf %65, %66 : vector<8x32xf32>
    %68 = vector.broadcast %47 : vector<1x32xf32> to vector<8x32xf32>
    %69 = arith.addf %67, %68 : vector<8x32xf32>
    %c0_35 = arith.constant 0 : index
    %c0_36 = arith.constant 0 : index
    %c0_37 = arith.constant 0 : index
    %70 = vector.load %arg11[%c0_35, %c0_36, %c0_37] : memref<1x32x64xbf16, #tpu.memory_space<vmem>>, vector<1x32x64xbf16>
    %71 = vector.shape_cast %70 : vector<1x32x64xbf16> to vector<32x64xbf16>
    %72 = arith.truncf %69 : vector<8x32xf32> to vector<8x32xbf16>
    %cst_38 = arith.constant dense<0.000000e+00> : vector<8x64xf32>
    %73 = tpu.matmul %72, %71, %cst_38 {dimension_numbers = #tpu.dot_dimension_numbers<[1], [0], [0], [1], [0, 0, 1, 1], [], []>} : vector<8x32xbf16>, vector<32x64xbf16>, vector<8x64xf32> -> vector<8x64xf32>
    %c0_39 = arith.constant 0 : index
    %c0_40 = arith.constant 0 : index
    %c0_41 = arith.constant 0 : index
    %74 = vector.load %arg12[%c0_39, %c0_40, %c0_41] : memref<1x1x64xf32, #tpu.memory_space<vmem>>, vector<1x1x64xf32>
    %75 = vector.shape_cast %74 : vector<1x1x64xf32> to vector<1x64xf32>
    %76 = vector.broadcast %75 : vector<1x64xf32> to vector<8x64xf32>
    %77 = arith.addf %73, %76 : vector<8x64xf32>
    %cst_42 = arith.constant 0.000000e+00 : f32
    %78 = vector.broadcast %cst_42 : f32 to vector<8x64xf32>
    %79 = arith.maximumf %77, %78 : vector<8x64xf32>
    %c0_43 = arith.constant 0 : index
    %c0_44 = arith.constant 0 : index
    %c0_45 = arith.constant 0 : index
    %80 = vector.load %arg13[%c0_43, %c0_44, %c0_45] : memref<1x64x32xbf16, #tpu.memory_space<vmem>>, vector<1x64x32xbf16>
    %81 = vector.shape_cast %80 : vector<1x64x32xbf16> to vector<64x32xbf16>
    %82 = arith.truncf %79 : vector<8x64xf32> to vector<8x64xbf16>
    %cst_46 = arith.constant dense<0.000000e+00> : vector<8x32xf32>
    %83 = tpu.matmul %82, %81, %cst_46 {dimension_numbers = #tpu.dot_dimension_numbers<[1], [0], [0], [1], [0, 0, 1, 1], [], []>} : vector<8x64xbf16>, vector<64x32xbf16>, vector<8x32xf32> -> vector<8x32xf32>
    %c0_47 = arith.constant 0 : index
    %c0_48 = arith.constant 0 : index
    %c0_49 = arith.constant 0 : index
    %84 = vector.load %arg14[%c0_47, %c0_48, %c0_49] : memref<1x1x32xf32, #tpu.memory_space<vmem>>, vector<1x1x32xf32>
    %85 = vector.shape_cast %84 : vector<1x1x32xf32> to vector<1x32xf32>
    %86 = vector.broadcast %85 : vector<1x32xf32> to vector<8x32xf32>
    %87 = arith.addf %83, %86 : vector<8x32xf32>
    %88 = arith.addf %69, %87 : vector<8x32xf32>
    %c0_50 = arith.constant 0 : index
    %c0_51 = arith.constant 0 : index
    %c0_52 = arith.constant 0 : index
    %89 = vector.load %arg9[%c0_50, %c0_51, %c0_52] : memref<1x1x32xf32, #tpu.memory_space<vmem>>, vector<1x1x32xf32>
    %90 = vector.shape_cast %89 : vector<1x1x32xf32> to vector<1x32xf32>
    %c0_53 = arith.constant 0 : index
    %c0_54 = arith.constant 0 : index
    %c0_55 = arith.constant 0 : index
    %91 = vector.load %arg10[%c0_53, %c0_54, %c0_55] : memref<1x1x32xf32, #tpu.memory_space<vmem>>, vector<1x1x32xf32>
    %92 = vector.shape_cast %91 : vector<1x1x32xf32> to vector<1x32xf32>
    %cst_56 = arith.constant dense<0.000000e+00> : vector<8xf32>
    %93 = vector.multi_reduction <add>, %88, %cst_56 [1] : vector<8x32xf32> to vector<8xf32>
    %94 = vector.shape_cast %93 : vector<8xf32> to vector<8x1xf32>
    %cst_57 = arith.constant 3.200000e+01 : f32
    %95 = vector.broadcast %cst_57 : f32 to vector<8x1xf32>
    %96 = arith.divf %94, %95 : vector<8x1xf32>
    %97 = vector.broadcast %96 : vector<8x1xf32> to vector<8x32xf32>
    %98 = arith.subf %88, %97 : vector<8x32xf32>
    %99 = arith.mulf %98, %98 : vector<8x32xf32>
    %cst_58 = arith.constant dense<0.000000e+00> : vector<8xf32>
    %100 = vector.multi_reduction <add>, %99, %cst_58 [1] : vector<8x32xf32> to vector<8xf32>
    %101 = vector.shape_cast %100 : vector<8xf32> to vector<8x1xf32>
    %cst_59 = arith.constant 3.200000e+01 : f32
    %102 = vector.broadcast %cst_59 : f32 to vector<8x1xf32>
    %103 = arith.divf %101, %102 : vector<8x1xf32>
    %104 = vector.broadcast %96 : vector<8x1xf32> to vector<8x32xf32>
    %105 = arith.subf %88, %104 : vector<8x32xf32>
    %cst_60 = arith.constant 9.99999974E-6 : f32
    %106 = vector.broadcast %cst_60 : f32 to vector<8x1xf32>
    %107 = arith.addf %103, %106 : vector<8x1xf32>
    %108 = math.rsqrt %107 : vector<8x1xf32>
    %109 = vector.broadcast %108 : vector<8x1xf32> to vector<8x32xf32>
    %110 = arith.mulf %105, %109 : vector<8x32xf32>
    %111 = vector.broadcast %90 : vector<1x32xf32> to vector<8x32xf32>
    %112 = arith.mulf %110, %111 : vector<8x32xf32>
    %113 = vector.broadcast %92 : vector<1x32xf32> to vector<8x32xf32>
    %114 = arith.addf %112, %113 : vector<8x32xf32>
    %c0_61 = arith.constant 0 : index
    %c0_62 = arith.constant 0 : index
    %115 = vector.load %arg17[%c0_61, %c0_62] : memref<8x32xf32, #tpu.memory_space<vmem>>, vector<8x32xf32>
    tpu.vector_store %arg17[%c0_61, %c0_62], %114 {strides = array<i32>} : memref<8x32xf32, #tpu.memory_space<vmem>>, vector<8x32xf32>,
    %c0_63 = arith.constant 0 : index
    %c0_64 = arith.constant 0 : index
    %c0_65 = arith.constant 0 : index
    %116 = vector.load %arg16[%c0_63, %c0_64, %c0_65] : memref<1x8x32xf32, #tpu.memory_space<vmem>>, vector<1x8x32xf32>
    %117 = vector.shape_cast %116 : vector<1x8x32xf32> to vector<8x32xf32>
    %118 = vector.shape_cast %114 : vector<8x32xf32> to vector<1x8x32xf32>
    tpu.vector_store %arg16[%c0_63, %c0_64, %c0_65], %118 {strides = array<i32>} : memref<1x8x32xf32, #tpu.memory_space<vmem>>, vector<1x8x32xf32>,
    return
  }
  func.func @transform_0(%arg0: i32, %arg1: i32) -> (i32, i32, i32) {
    %c0_i32 = arith.constant 0 : i32
    %c0_i32_0 = arith.constant 0 : i32
    %c0_i32_1 = arith.constant 0 : i32
    return %arg0, %c0_i32, %c0_i32_0 : i32, i32, i32
  }
  func.func @transform_1(%arg0: i32, %arg1: i32) -> (i32, i32, i32) {
    %c0_i32 = arith.constant 0 : i32
    %c0_i32_0 = arith.constant 0 : i32
    %c0_i32_1 = arith.constant 0 : i32
    return %arg1, %c0_i32, %c0_i32_0 : i32, i32, i32
  }
  func.func @transform_2(%arg0: i32, %arg1: i32) -> (i32, i32, i32) {
    %c0_i32 = arith.constant 0 : i32
    %c0_i32_0 = arith.constant 0 : i32
    %c0_i32_1 = arith.constant 0 : i32
    return %arg1, %c0_i32, %c0_i32_0 : i32, i32, i32
  }
  func.func @transform_3(%arg0: i32, %arg1: i32) -> (i32, i32, i32) {
    %c0_i32 = arith.constant 0 : i32
    %c0_i32_0 = arith.constant 0 : i32
    %c0_i32_1 = arith.constant 0 : i32
    return %arg1, %c0_i32, %c0_i32_0 : i32, i32, i32
  }
  func.func @transform_4(%arg0: i32, %arg1: i32) -> (i32, i32, i32) {
    %c0_i32 = arith.constant 0 : i32
    %c0_i32_0 = arith.constant 0 : i32
    %c0_i32_1 = arith.constant 0 : i32
    return %arg1, %c0_i32, %c0_i32_0 : i32, i32, i32
  }
  func.func @transform_5(%arg0: i32, %arg1: i32) -> (i32, i32, i32) {
    %c0_i32 = arith.constant 0 : i32
    %c0_i32_0 = arith.constant 0 : i32
    %c0_i32_1 = arith.constant 0 : i32
    return %arg1, %c0_i32, %c0_i32_0 : i32, i32, i32
  }
  func.func @transform_6(%arg0: i32, %arg1: i32) -> (i32, i32, i32) {
    %c0_i32 = arith.constant 0 : i32
    %c0_i32_0 = arith.constant 0 : i32
    %c0_i32_1 = arith.constant 0 : i32
    return %arg1, %c0_i32, %c0_i32_0 : i32, i32, i32
  }
  func.func @transform_7(%arg0: i32, %arg1: i32) -> (i32, i32, i32) {
    %c0_i32 = arith.constant 0 : i32
    %c0_i32_0 = arith.constant 0 : i32
    %c0_i32_1 = arith.constant 0 : i32
    return %arg1, %c0_i32, %c0_i32_0 : i32, i32, i32
  }
  func.func @transform_8(%arg0: i32, %arg1: i32) -> (i32, i32, i32) {
    %c0_i32 = arith.constant 0 : i32
    %c0_i32_0 = arith.constant 0 : i32
    %c0_i32_1 = arith.constant 0 : i32
    return %arg1, %c0_i32, %c0_i32_0 : i32, i32, i32
  }
  func.func @transform_9(%arg0: i32, %arg1: i32) -> (i32, i32, i32) {
    %c0_i32 = arith.constant 0 : i32
    %c0_i32_0 = arith.constant 0 : i32
    %c0_i32_1 = arith.constant 0 : i32
    return %arg1, %c0_i32, %c0_i32_0 : i32, i32, i32
  }
  func.func @transform_10(%arg0: i32, %arg1: i32) -> (i32, i32, i32) {
    %c0_i32 = arith.constant 0 : i32
    %c0_i32_0 = arith.constant 0 : i32
    %c0_i32_1 = arith.constant 0 : i32
    return %arg1, %c0_i32, %c0_i32_0 : i32, i32, i32
  }
  func.func @transform_11(%arg0: i32, %arg1: i32) -> (i32, i32, i32) {
    %c0_i32 = arith.constant 0 : i32
    %c0_i32_0 = arith.constant 0 : i32
    %c0_i32_1 = arith.constant 0 : i32
    return %arg1, %c0_i32, %c0_i32_0 : i32, i32, i32
  }
  func.func @transform_12(%arg0: i32, %arg1: i32) -> (i32, i32, i32) {
    %c0_i32 = arith.constant 0 : i32
    %c0_i32_0 = arith.constant 0 : i32
    %c0_i32_1 = arith.constant 0 : i32
    return %arg1, %c0_i32, %c0_i32_0 : i32, i32, i32
  }
  func.func @transform_13(%arg0: i32, %arg1: i32) -> (i32, i32, i32, i32) {
    %c0_i32 = arith.constant 0 : i32
    %c0_i32_0 = arith.constant 0 : i32
    %c0_i32_1 = arith.constant 0 : i32
    return %arg1, %arg0, %c0_i32, %c0_i32_0 : i32, i32, i32, i32
  }
  func.func @transform_14(%arg0: i32, %arg1: i32) -> (i32, i32, i32) {
    %c0_i32 = arith.constant 0 : i32
    %c0_i32_0 = arith.constant 0 : i32
    %c0_i32_1 = arith.constant 0 : i32
    return %arg0, %c0_i32, %c0_i32_0 : i32, i32, i32
  }
}

</mosaic_0001>

<llo_original>
// kernel: transformer_forward.3
$region0: #{transformer_forward.3}
  #allocation0 [shape = 'u32[]', space=smem, size = 0x4, offset = 0x4, fixed_abs, tag = 'smem constant byte address 0x4 - core index']
  #allocation1 [shape = 'u32[144,128]{1,0:T(1,128)}', space=vmem, size = 0x12000, scoped, tag = 'internal scratch']
  %s0 = inlined_call_operand.vmem [shape: f32[2,8,32], index: 0, kind: input, shape index: {}]
  %s1 = inlined_call_operand.vmem [shape: bf16[32,8], index: 1, kind: input, shape index: {}]
  %s2 = inlined_call_operand.vmem [shape: f32[1,8], index: 2, kind: input, shape index: {}]
  %s3 = inlined_call_operand.hbm [shape: f32[2,8,8], index: 3, kind: output, shape index: {}]
  %s4 = sld [smem:[#allocation0]]
  $region45: #{transformer_forward.3} parent=0
    _
  %s6 = ssub.s32 1, %s4
  %s7 = scalar_select 0, %s6, %s4
  $region1: #{transformer_forward.3} parent=0
    #allocation2 [shape = 'u8[8192]{0}', space=vmem, size = 0x2000, scoped, tag = 'output window, operand 0']
    #allocation3 [shape = 's32[2]{0}', space=sflag, size = 0x8, scoped, tag = 'scoped memory for transformer_forward.3']
    %8 = vsyncpa [#allocation3], 0
    %s9 = scalar_lea.sflag [#allocation3], 1
    %10 = vsyncpa %s9, 0
    loop: start=0, step=1, limit=4
    $region2: #{transformer_forward.3} parent=1 // loop_pre_header
      _
    $region3: #{transformer_forward.3} parent=1 // loop_header
      %s12 = sphi 0, %s16
      %p13 = scmp.ge.s32.totalorder %s12, 4
      %s22 = sphi 0, %s24
      %s25 = sphi 0, %s22
      %s26 = sphi 0, %s25
      %s42 = sphi 0, %s26
      %s46 = sphi 0, %s46
      %s48 = sphi 0, %s46
      %s49 = sphi 0, %s48
      %s63 = sphi 0, %s49
      %s67 = sphi 0, %s67
      %s69 = sphi 0, %s67
      %s70 = sphi 0, %s69
      %s84 = sphi 0, %s70
      %s90 = sphi 0, %s92
      %s93 = sphi 0, %s90
      %s94 = sphi 0, %s93
      %s110 = sphi 0, %s94
    $region4: #{transformer_forward.3} parent=1 // loop_header_branch
      %15 = sbr.rel (%p13) target = $region8
    $region5: #{transformer_forward.3} parent=1 // loop_body
      %s17 = ssub.s32 %s12, 1
      %s18 = ssub.s32 %s12, 2
      %s19 = sadd.s32 %s12, 1
      %s20 = ssub.s32 %s12, %s19
      %p21 = scmp.eq.s32.totalorder %s20, 0
      %s23 = sadd.s32 %s22, 1
      %s24 = scalar_select %p21, %s22, %s23
      %p27 = pneg %p21
      %p28 = scmp.eq.s32.totalorder %s12, 1
      %p29 = por %p27, %p28
      %p30 = scmp.ne.s32.totalorder %s22, %s25
      %p31 = scmp.eq.s32.totalorder %s12, 0
      %p32 = por %p30, %p31
      %p33 = scmp.ne.s32.totalorder %s22, %s25
      %p34 = scmp.eq.s32.totalorder %s17, 1
      %p35 = por %p33, %p34
      %p36 = scmp.ne.s32.totalorder %s25, %s26
      %p37 = scmp.eq.s32.totalorder %s17, 0
      %p38 = por %p36, %p37
      %p39 = scmp.ne.s32.totalorder %s25, %s26
      %p40 = scmp.eq.s32.totalorder %s18, 1
      %p41 = por %p39, %p40
      %p43 = scmp.ne.s32.totalorder %s26, %s42
      %p44 = scmp.eq.s32.totalorder %s18, 0
      %p45 = por %p43, %p44
      %s47 = sadd.s32 %s46, 1
      %p50 = scmp.eq.s32.totalorder %s12, 1
      %p51 = scmp.ne.s32.totalorder %s46, %s48
      %p52 = scmp.eq.s32.totalorder %s12, 0
      %p53 = por %p51, %p52
      %p54 = scmp.ne.s32.totalorder %s46, %s48
      %p55 = scmp.eq.s32.totalorder %s17, 1
      %p56 = por %p54, %p55
      %p57 = scmp.ne.s32.totalorder %s48, %s49
      %p58 = scmp.eq.s32.totalorder %s17, 0
      %p59 = por %p57, %p58
      %p60 = scmp.ne.s32.totalorder %s48, %s49
      %p61 = scmp.eq.s32.totalorder %s18, 1
      %p62 = por %p60, %p61
      %p64 = scmp.ne.s32.totalorder %s49, %s63
      %p65 = scmp.eq.s32.totalorder %s18, 0
      %p66 = por %p64, %p65
      %s68 = sadd.s32 %s67, 1
      %p71 = scmp.eq.s32.totalorder %s12, 1
      %p72 = scmp.ne.s32.totalorder %s67, %s69
      %p73 = scmp.eq.s32.totalorder %s12, 0
      %p74 = por %p72, %p73
      %p75 = scmp.ne.s32.totalorder %s67, %s69
      %p76 = scmp.eq.s32.totalorder %s17, 1
      %p77 = por %p75, %p76
      %p78 = scmp.ne.s32.totalorder %s69, %s70
      %p79 = scmp.eq.s32.totalorder %s17, 0
      %p80 = por %p78, %p79
      %p81 = scmp.ne.s32.totalorder %s69, %s70
      %p82 = scmp.eq.s32.totalorder %s18, 1
      %p83 = por %p81, %p82
      %p85 = scmp.ne.s32.totalorder %s70, %s84
      %p86 = scmp.eq.s32.totalorder %s18, 0
      %p87 = por %p85, %p86
      %s88 = ssub.s32 %s12, %s19
      %p89 = scmp.eq.s32.totalorder %s88, 0
      %s91 = sadd.s32 %s90, 1
      %s92 = scalar_select %p89, %s90, %s91
      %p95 = pneg %p89
      %p96 = scmp.eq.s32.totalorder %s12, 1
      %p97 = por %p95, %p96
      %p98 = scmp.ne.s32.totalorder %s90, %s93
      %p99 = scmp.eq.s32.totalorder %s12, 0
      %p100 = por %p98, %p99
      %p101 = scmp.ne.s32.totalorder %s90, %s93
      %p102 = scmp.eq.s32.totalorder %s17, 1
      %p103 = por %p101, %p102
      %p104 = scmp.ne.s32.totalorder %s93, %s94
      %p105 = scmp.eq.s32.totalorder %s17, 0
      %p106 = por %p104, %p105
      %p107 = scmp.ne.s32.totalorder %s93, %s94
      %p108 = scmp.eq.s32.totalorder %s18, 1
      %p109 = por %p107, %p108
      %p111 = scmp.ne.s32.totalorder %s94, %s110
      %p112 = scmp.eq.s32.totalorder %s18, 0
      %p113 = por %p111, %p112
      %p114 = scmp.le.s32.totalorder 1, %s12
      %p115 = scmp.lt.s32.totalorder %s12, 3
      %p116 = pnand %p114, %p115
      %p117 = pneg %p116
      // Predicated region
      $region9: #{transformer_forward.3} parent=5 // pred_check
        _
      $region10: #{transformer_forward.3} parent=5 // pred_check_branch
        %119 = sbr.rel (%p116) target = $region12
      $region11: #{transformer_forward.3} parent=5 // pred_region
        %s120 = ssub.s32 %s12, 1
        // Predicated region
        $region13: #{transformer_forward.3} parent=11 // pred_check
          %p121 = pneg %p59
        $region14: #{transformer_forward.3} parent=11 // pred_check_branch
          %123 = sbr.rel (%p121) target = $region16
        $region15: #{transformer_forward.3} parent=11 // pred_region
          _
        $region16: #{transformer_forward.3} parent=11 // pred_fallthru
          _
        // Predicated region
        $region17: #{transformer_forward.3} parent=11 // pred_check
          %p124 = pneg %p80
        $region18: #{transformer_forward.3} parent=11 // pred_check_branch
          %126 = sbr.rel (%p124) target = $region20
        $region19: #{transformer_forward.3} parent=11 // pred_region
          _
        $region20: #{transformer_forward.3} parent=11 // pred_fallthru
          _
      $region12: #{transformer_forward.3} parent=5 // pred_fallthru
        _
      %p127 = scmp.lt.s32.totalorder %s12, 2
      // Predicated region
      $region21: #{transformer_forward.3} parent=5 // pred_check
        %p128 = pneg %p127
      $region22: #{transformer_forward.3} parent=5 // pred_check_branch
        %130 = sbr.rel (%p128) target = $region24
      $region23: #{transformer_forward.3} parent=5 // pred_region
        // Predicated region
        $region25: #{transformer_forward.3} parent=23 // pred_check
          %p131 = pneg %p32
        $region26: #{transformer_forward.3} parent=23 // pred_check_branch
          %133 = sbr.rel (%p131) target = $region28
        $region27: #{transformer_forward.3} parent=23 // pred_region
          %p134 = scmp.lt.s32.totalorder %s12, 1
          %s135 = scalar_select %p134, %s12, 1
          %s136 = smul.addr %s135, 8
          %s137 = scalar_lea.vmem %s0, %s136
        $region28: #{transformer_forward.3} parent=23 // pred_fallthru
          _
      $region24: #{transformer_forward.3} parent=5 // pred_fallthru
        _
      %p138 = scmp.le.s32.totalorder 1, %s12
      %p139 = scmp.lt.s32.totalorder %s12, 3
      %p140 = pnand %p138, %p139
      %p141 = pneg %p140
      // Predicated region
      $region29: #{transformer_forward.3} parent=5 // pred_check
        _
      $region30: #{transformer_forward.3} parent=5 // pred_check_branch
        %143 = sbr.rel (%p140) target = $region32
      $region31: #{transformer_forward.3} parent=5 // pred_region
        %s144 = ssub.s32 %s12, 1
        %p145 = scmp.lt.s32.totalorder %s17, 1
        %s146 = scalar_select %p145, %s17, 1
        %s147 = smul.addr %s146, 8
        %s148 = scalar_lea.vmem %s0, %s147
        %p149 = pneg %p38
        %p150 = pneg %p35
        %p151 = pneg %p59
        %p152 = pneg %p56
        %p153 = pneg %p80
        %p154 = pneg %p77
        %p155 = pneg %p106
        %p156 = pneg %p103
        %s157 = sand.u32 %s93, 1
        %s158 = scalar_lea.sflag [#allocation3], %s157
        %s159 = sand.u32 %s93, 1
        %s160 = smul.addr %s159, 8
        %s161 = scalar_lea.vmem [#allocation2], %s160
        %p162 = scmp.lt.s32.totalorder %s17, 1
        %s163 = scalar_select %p162, %s17, 1
        %s164 = smul.addr %s163, 8
        %s165 = scalar_lea.vmem %s0, %s164
        %v167 = vld [vmem:[%s165] sm:$0xff]
        %v168 = vld [vmem:[%s1] sm:$0xf]
        %v169 = vld [vmem:[%s1 + $0x4] sm:$0xf]
        %v170 = vld [vmem:[%s1 + $0x8] sm:$0xf]
        %v171 = vld [vmem:[%s1 + $0xc] sm:$0xf]
        %v172 = vpack.c.bf16 %v167, %v167
        %v173 = vld [vmem:[%s2] sm:$0x1]
        %v175 = vlaneseq
        %v176 = vshrl.u32 %v175, 7
        %v177 = vsub.s32 0, %v176
        %v178 = vrot.slane %v173, %v177
        %v184 = vunpack.c.l.b16 %v168
        %v185 = vunpack.c.l.b16 %v169
        %v186 = vunpack.c.l.b16 %v170
        %v187 = vunpack.c.l.b16 %v171
        %v188 = vpack.c.b16 %v185, %v184
        %v189 = vpack.c.b16 %v187, %v186
        %vm192 = vcmask 261120
        %v194 = vsel %vm192, %v172, 0
        %196 = vmatprep.subr.bf16.mxu0 0
        %197 = vmatpush1.bf16.msra.mxu0 0
        %198 = vmatprep.subr.bf16.mxu0 0
        %199 = vmatpush1.bf16.msra.mxu0 0
        %200 = vmatprep.subr.bf16.mxu0 0
        %201 = vmatpush1.bf16.msra.mxu0 0
        %202 = vmatprep.subr.bf16.mxu0 0
        %203 = vmatpush1.bf16.msra.mxu0 0
        %204 = vmatprep.subr.bf16.mxu0 0
        %205 = vmatpush1.bf16.msra.mxu0 0
        %206 = vmatprep.subr.bf16.mxu0 0
        %207 = vmatpush1.bf16.msra.mxu0 0
        %208 = vmatprep.subr.bf16.mxu0 0
        %209 = vmatpush1.bf16.msra.mxu0 %v189
        %210 = vmatprep.subr.bf16.mxu0 0
        %211 = vmatpush1.bf16.msra.mxu0 %v188
        %212 = vmatprep.subr.bf16.mxu0 0
        %213 = vmatpush2.bf16.msra.mxu0 0
        %214 = vmatprep.subr.bf16.mxu0 0
        %215 = vmatpush2.bf16.msra.mxu0 0
        %216 = vmatprep.subr.bf16.mxu0 0
        %217 = vmatpush2.bf16.msra.mxu0 0
        %218 = vmatprep.subr.bf16.mxu0 0
        %219 = vmatpush2.bf16.msra.mxu0 0
        %220 = vmatprep.subr.bf16.mxu0 0
        %221 = vmatpush2.bf16.msra.mxu0 0
        %222 = vmatprep.subr.bf16.mxu0 0
        %223 = vmatpush2.bf16.msra.mxu0 0
        %224 = vmatprep.subr.bf16.mxu0 0
        %225 = vmatpush2.bf16.msra.mxu0 0
        %226 = vmatprep.subr.bf16.mxu0 0
        %227 = vmatpush2.bf16.msra.mxu0 0
        %228 = vmatprep.mubr.bf16.mxu0 0
        %229 = vmatmul.mubr.bf16.gmra.mxu0 %v194
        %v230 = vpop.f32.mrf.mxu0
        %v231 = vadd.f32 %v178, %v230
        %v232 = vpop.f32.mrf.mxu0
        %v233 = vpop.f32.mrf.mxu0
        %v234 = vpop.f32.mrf.mxu0
        %235 = vdwg.mxu0
        %vm236 = vcmask 64512
        %v237 = vsel %vm236, %v231, -inf
        %238 = vmax.xlane.f32.xlu0 %v237
        %v239 = vpop.xlane.xlu0 %238
        %v240 = vsub.f32 %v231, %v239
        %v241 = vmul.f32 %v240, 1.442695
        %v242 = vpow.pop %v241
        %v243 = vsel %vm236, %v242, 0.0
        %244 = vadd.xlane.f32.xlu0 %v243
        %v245 = vpop.xlane.xlu0 %244
        %v246 = vlog2.pop %v245
        %v247 = vmul.f32 %v246, 0.6931472
        %v248 = vsub.f32 %v240, %v247
        %249 = vst.msk [vmem:[%s161] sm:$0xff] %vm236, %v248
        %s250 = sand.u32 %s93, 1
        %s251 = scalar_lea.sflag [#allocation3], %s250
        %s252 = sand.u32 %s93, 1
        %s253 = smul.addr %s252, 8
        %s254 = scalar_lea.vmem [#allocation2], %s253
        // Predicated region
        $region33: #{transformer_forward.3} parent=31 // pred_check
          %p255 = pneg %p103
        $region34: #{transformer_forward.3} parent=31 // pred_check_branch
          %257 = sbr.rel (%p255) target = $region36
        $region35: #{transformer_forward.3} parent=31 // pred_region
          %s259 = ssub.s32 128, 128
          %260 = vsyncadd %s251, %s259
          %s261 = smul.addr %s17, 128
          %s262 = scalar_lea.hbm %s3, %s261
          %s264 = sshll.u32 %s254, 4
          %s265 = int_to_ptr.vmem [resolvable:$true] %s264
          %267 = dma.vmem_to_hbm [thread:$0]  %s265, 128, %s262, %s251
        $region36: #{transformer_forward.3} parent=31 // pred_fallthru
          _
      $region32: #{transformer_forward.3} parent=5 // pred_fallthru
        _
      %p268 = scmp.le.s32.totalorder 2, %s12
      // Predicated region
      $region37: #{transformer_forward.3} parent=5 // pred_check
        %p269 = pneg %p268
      $region38: #{transformer_forward.3} parent=5 // pred_check_branch
        %271 = sbr.rel (%p269) target = $region40
      $region39: #{transformer_forward.3} parent=5 // pred_region
        %s272 = ssub.s32 %s12, 2
        // Predicated region
        $region41: #{transformer_forward.3} parent=39 // pred_check
          %p273 = pneg %p109
        $region42: #{transformer_forward.3} parent=39 // pred_check_branch
          %275 = sbr.rel (%p273) target = $region44
        $region43: #{transformer_forward.3} parent=39 // pred_region
          %s276 = sand.u32 %s94, 1
          %s277 = scalar_lea.sflag [#allocation3], %s276
          %s278 = sand.u32 %s94, 1
          %s279 = smul.addr %s278, 8
          %s280 = scalar_lea.vmem [#allocation2], %s279
          %281 = dma.done %s277, 128
        $region44: #{transformer_forward.3} parent=39 // pred_fallthru
          _
      $region40: #{transformer_forward.3} parent=5 // pred_fallthru
        _
    $region6: #{transformer_forward.3} parent=1 // loop_footer
      %s16 = sadd.s32 1, %s12
    $region7: #{transformer_forward.3} parent=1 // loop_footer_branch
      %11 = sbr.rel target = $region3
    $region8: #{transformer_forward.3} parent=1 // loop_exit
      _
    %282 = vsyncpa [#allocation3], 1
    %s283 = scalar_lea.sflag [#allocation3], 1
    %284 = vsyncpa %s283, 1

// kernel: transformer_forward.2
$region0: #{transformer_forward.2}
  #allocation0 [shape = 'u32[]', space=smem, size = 0x4, offset = 0x4, fixed_abs, tag = 'smem constant byte address 0x4 - core index']
  #allocation1 [shape = 'u32[144,128]{1,0:T(1,128)}', space=vmem, size = 0x12000, scoped, tag = 'internal scratch']
  #allocation2 [shape = 'f32[8,32]{1,0:T(8,128)}', space=vmem, size = 0x1000, scoped, tag = 'scratch operand']
  %s0 = inlined_call_operand.vmem [shape: f32[2,8,32], index: 0, kind: input, shape index: {}]
  %s1 = inlined_call_operand.vmem [shape: bf16[2,32,96], index: 1, kind: input, shape index: {}]
  %s2 = inlined_call_operand.vmem [shape: f32[2,1,96], index: 2, kind: input, shape index: {}]
  %s3 = inlined_call_operand.vmem [shape: bf16[2,32,32], index: 3, kind: input, shape index: {}]
  %s4 = inlined_call_operand.vmem [shape: f32[2,1,32], index: 4, kind: input, shape index: {}]
  %s5 = inlined_call_operand.vmem [shape: f32[2,1,32], index: 5, kind: input, shape index: {}]
  %s6 = inlined_call_operand.vmem [shape: f32[2,1,32], index: 6, kind: input, shape index: {}]
  %s7 = inlined_call_operand.vmem [shape: f32[2,1,32], index: 7, kind: input, shape index: {}]
  %s8 = inlined_call_operand.vmem [shape: f32[2,1,32], index: 8, kind: input, shape index: {}]
  %s9 = inlined_call_operand.vmem [shape: bf16[2,32,64], index: 9, kind: input, shape index: {}]
  %s10 = inlined_call_operand.vmem [shape: f32[2,1,64], index: 10, kind: input, shape index: {}]
  %s11 = inlined_call_operand.vmem [shape: bf16[2,64,32], index: 11, kind: input, shape index: {}]
  %s12 = inlined_call_operand.vmem [shape: f32[2,1,32], index: 12, kind: input, shape index: {}]
  %s13 = inlined_call_operand.vmem [shape: f32[2,2,8,8], index: 13, kind: output, shape index: {0}]
  %s14 = inlined_call_operand.vmem [shape: f32[2,8,32], index: 14, kind: output, shape index: {1}]
  %15 = xla_tuple %s13, %s14
  %s16 = sld [smem:[#allocation0]]
  $region97: #{transformer_forward.2} parent=0
    _
  %s18 = ssub.s32 1, %s16
  %s19 = scalar_select 0, %s18, %s16
  loop: start=0, step=1, limit=6
  $region2: #{transformer_forward.2} parent=0 // loop_pre_header
    _
  $region3: #{transformer_forward.2} parent=0 // loop_header
    %s21 = sphi 0, %s25
    %p22 = scmp.ge.s32.totalorder %s21, 6
    %s28 = sphi 0, %s40
    %s29 = sphi 0, %s36
    %s30 = sphi 0, %s28
    %s31 = sphi 0, %s29
    %s32 = sphi 0, %s30
    %s33 = sphi 0, %s31
    %s43 = sphi 0, %s45
    %s46 = sphi 0, %s43
    %s47 = sphi 0, %s46
    %s63 = sphi 0, %s47
    %s69 = sphi 0, %s71
    %s72 = sphi 0, %s69
    %s73 = sphi 0, %s72
    %s89 = sphi 0, %s73
    %s95 = sphi 0, %s97
    %s98 = sphi 0, %s95
    %s99 = sphi 0, %s98
    %s115 = sphi 0, %s99
    %s121 = sphi 0, %s123
    %s124 = sphi 0, %s121
    %s125 = sphi 0, %s124
    %s141 = sphi 0, %s125
    %s147 = sphi 0, %s149
    %s150 = sphi 0, %s147
    %s151 = sphi 0, %s150
    %s167 = sphi 0, %s151
    %s173 = sphi 0, %s175
    %s176 = sphi 0, %s173
    %s177 = sphi 0, %s176
    %s193 = sphi 0, %s177
    %s199 = sphi 0, %s201
    %s202 = sphi 0, %s199
    %s203 = sphi 0, %s202
    %s219 = sphi 0, %s203
    %s225 = sphi 0, %s227
    %s228 = sphi 0, %s225
    %s229 = sphi 0, %s228
    %s245 = sphi 0, %s229
    %s251 = sphi 0, %s253
    %s254 = sphi 0, %s251
    %s255 = sphi 0, %s254
    %s271 = sphi 0, %s255
    %s277 = sphi 0, %s279
    %s280 = sphi 0, %s277
    %s281 = sphi 0, %s280
    %s297 = sphi 0, %s281
    %s303 = sphi 0, %s305
    %s306 = sphi 0, %s303
    %s307 = sphi 0, %s306
    %s323 = sphi 0, %s307
    %s329 = sphi 0, %s331
    %s332 = sphi 0, %s329
    %s333 = sphi 0, %s332
    %s349 = sphi 0, %s333
    %s355 = sphi 0, %s357
    %s358 = sphi 0, %s355
    %s359 = sphi 0, %s358
    %s375 = sphi 0, %s359
    %s383 = sphi 0, %s385
    %s386 = sphi 0, %s383
    %s387 = sphi 0, %s386
    %s403 = sphi 0, %s387
    %s409 = sphi 0, %s411
    %s412 = sphi 0, %s409
    %s413 = sphi 0, %s412
    %s429 = sphi 0, %s413
  $region4: #{transformer_forward.2} parent=0 // loop_header_branch
    %24 = sbr.rel (%p22) target = $region8
  $region5: #{transformer_forward.2} parent=0 // loop_body
    %s26 = ssub.s32 %s21, 1
    %s27 = ssub.s32 %s21, 2
    %s34 = sadd.s32 1, %s29
    %p35 = scmp.ge.s32.totalorder %s34, 2
    %s36 = scalar_select %p35, 0, %s34
    %s37 = sadd.s32 1, %s28
    %s38 = scalar_select %p35, %s37, %s28
    %p39 = scmp.ge.s32.totalorder %s38, 2
    %s40 = scalar_select %p39, 0, %s38
    %s41 = ssub.s32 %s28, %s40
    %p42 = scmp.eq.s32.totalorder %s41, 0
    %s44 = sadd.s32 %s43, 1
    %s45 = scalar_select %p42, %s43, %s44
    %p48 = pneg %p42
    %p49 = scmp.eq.s32.totalorder %s21, 3
    %p50 = por %p48, %p49
    %p51 = scmp.ne.s32.totalorder %s43, %s46
    %p52 = scmp.eq.s32.totalorder %s21, 0
    %p53 = por %p51, %p52
    %p54 = scmp.ne.s32.totalorder %s43, %s46
    %p55 = scmp.eq.s32.totalorder %s26, 3
    %p56 = por %p54, %p55
    %p57 = scmp.ne.s32.totalorder %s46, %s47
    %p58 = scmp.eq.s32.totalorder %s26, 0
    %p59 = por %p57, %p58
    %p60 = scmp.ne.s32.totalorder %s46, %s47
    %p61 = scmp.eq.s32.totalorder %s27, 3
    %p62 = por %p60, %p61
    %p64 = scmp.ne.s32.totalorder %s47, %s63
    %p65 = scmp.eq.s32.totalorder %s27, 0
    %p66 = por %p64, %p65
    %s67 = ssub.s32 %s29, %s36
    %p68 = scmp.eq.s32.totalorder %s67, 0
    %s70 = sadd.s32 %s69, 1
    %s71 = scalar_select %p68, %s69, %s70
    %p74 = pneg %p68
    %p75 = scmp.eq.s32.totalorder %s21, 3
    %p76 = por %p74, %p75
    %p77 = scmp.ne.s32.totalorder %s69, %s72
    %p78 = scmp.eq.s32.totalorder %s21, 0
    %p79 = por %p77, %p78
    %p80 = scmp.ne.s32.totalorder %s69, %s72
    %p81 = scmp.eq.s32.totalorder %s26, 3
    %p82 = por %p80, %p81
    %p83 = scmp.ne.s32.totalorder %s72, %s73
    %p84 = scmp.eq.s32.totalorder %s26, 0
    %p85 = por %p83, %p84
    %p86 = scmp.ne.s32.totalorder %s72, %s73
    %p87 = scmp.eq.s32.totalorder %s27, 3
    %p88 = por %p86, %p87
    %p90 = scmp.ne.s32.totalorder %s73, %s89
    %p91 = scmp.eq.s32.totalorder %s27, 0
    %p92 = por %p90, %p91
    %s93 = ssub.s32 %s29, %s36
    %p94 = scmp.eq.s32.totalorder %s93, 0
    %s96 = sadd.s32 %s95, 1
    %s97 = scalar_select %p94, %s95, %s96
    %p100 = pneg %p94
    %p101 = scmp.eq.s32.totalorder %s21, 3
    %p102 = por %p100, %p101
    %p103 = scmp.ne.s32.totalorder %s95, %s98
    %p104 = scmp.eq.s32.totalorder %s21, 0
    %p105 = por %p103, %p104
    %p106 = scmp.ne.s32.totalorder %s95, %s98
    %p107 = scmp.eq.s32.totalorder %s26, 3
    %p108 = por %p106, %p107
    %p109 = scmp.ne.s32.totalorder %s98, %s99
    %p110 = scmp.eq.s32.totalorder %s26, 0
    %p111 = por %p109, %p110
    %p112 = scmp.ne.s32.totalorder %s98, %s99
    %p113 = scmp.eq.s32.totalorder %s27, 3
    %p114 = por %p112, %p113
    %p116 = scmp.ne.s32.totalorder %s99, %s115
    %p117 = scmp.eq.s32.totalorder %s27, 0
    %p118 = por %p116, %p117
    %s119 = ssub.s32 %s29, %s36
    %p120 = scmp.eq.s32.totalorder %s119, 0
    %s122 = sadd.s32 %s121, 1
    %s123 = scalar_select %p120, %s121, %s122
    %p126 = pneg %p120
    %p127 = scmp.eq.s32.totalorder %s21, 3
    %p128 = por %p126, %p127
    %p129 = scmp.ne.s32.totalorder %s121, %s124
    %p130 = scmp.eq.s32.totalorder %s21, 0
    %p131 = por %p129, %p130
    %p132 = scmp.ne.s32.totalorder %s121, %s124
    %p133 = scmp.eq.s32.totalorder %s26, 3
    %p134 = por %p132, %p133
    %p135 = scmp.ne.s32.totalorder %s124, %s125
    %p136 = scmp.eq.s32.totalorder %s26, 0
    %p137 = por %p135, %p136
    %p138 = scmp.ne.s32.totalorder %s124, %s125
    %p139 = scmp.eq.s32.totalorder %s27, 3
    %p140 = por %p138, %p139
    %p142 = scmp.ne.s32.totalorder %s125, %s141
    %p143 = scmp.eq.s32.totalorder %s27, 0
    %p144 = por %p142, %p143
    %s145 = ssub.s32 %s29, %s36
    %p146 = scmp.eq.s32.totalorder %s145, 0
    %s148 = sadd.s32 %s147, 1
    %s149 = scalar_select %p146, %s147, %s148
    %p152 = pneg %p146
    %p153 = scmp.eq.s32.totalorder %s21, 3
    %p154 = por %p152, %p153
    %p155 = scmp.ne.s32.totalorder %s147, %s150
    %p156 = scmp.eq.s32.totalorder %s21, 0
    %p157 = por %p155, %p156
    %p158 = scmp.ne.s32.totalorder %s147, %s150
    %p159 = scmp.eq.s32.totalorder %s26, 3
    %p160 = por %p158, %p159
    %p161 = scmp.ne.s32.totalorder %s150, %s151
    %p162 = scmp.eq.s32.totalorder %s26, 0
    %p163 = por %p161, %p162
    %p164 = scmp.ne.s32.totalorder %s150, %s151
    %p165 = scmp.eq.s32.totalorder %s27, 3
    %p166 = por %p164, %p165
    %p168 = scmp.ne.s32.totalorder %s151, %s167
    %p169 = scmp.eq.s32.totalorder %s27, 0
    %p170 = por %p168, %p169
    %s171 = ssub.s32 %s29, %s36
    %p172 = scmp.eq.s32.totalorder %s171, 0
    %s174 = sadd.s32 %s173, 1
    %s175 = scalar_select %p172, %s173, %s174
    %p178 = pneg %p172
    %p179 = scmp.eq.s32.totalorder %s21, 3
    %p180 = por %p178, %p179
    %p181 = scmp.ne.s32.totalorder %s173, %s176
    %p182 = scmp.eq.s32.totalorder %s21, 0
    %p183 = por %p181, %p182
    %p184 = scmp.ne.s32.totalorder %s173, %s176
    %p185 = scmp.eq.s32.totalorder %s26, 3
    %p186 = por %p184, %p185
    %p187 = scmp.ne.s32.totalorder %s176, %s177
    %p188 = scmp.eq.s32.totalorder %s26, 0
    %p189 = por %p187, %p188
    %p190 = scmp.ne.s32.totalorder %s176, %s177
    %p191 = scmp.eq.s32.totalorder %s27, 3
    %p192 = por %p190, %p191
    %p194 = scmp.ne.s32.totalorder %s177, %s193
    %p195 = scmp.eq.s32.totalorder %s27, 0
    %p196 = por %p194, %p195
    %s197 = ssub.s32 %s29, %s36
    %p198 = scmp.eq.s32.totalorder %s197, 0
    %s200 = sadd.s32 %s199, 1
    %s201 = scalar_select %p198, %s199, %s200
    %p204 = pneg %p198
    %p205 = scmp.eq.s32.totalorder %s21, 3
    %p206 = por %p204, %p205
    %p207 = scmp.ne.s32.totalorder %s199, %s202
    %p208 = scmp.eq.s32.totalorder %s21, 0
    %p209 = por %p207, %p208
    %p210 = scmp.ne.s32.totalorder %s199, %s202
    %p211 = scmp.eq.s32.totalorder %s26, 3
    %p212 = por %p210, %p211
    %p213 = scmp.ne.s32.totalorder %s202, %s203
    %p214 = scmp.eq.s32.totalorder %s26, 0
    %p215 = por %p213, %p214
    %p216 = scmp.ne.s32.totalorder %s202, %s203
    %p217 = scmp.eq.s32.totalorder %s27, 3
    %p218 = por %p216, %p217
    %p220 = scmp.ne.s32.totalorder %s203, %s219
    %p221 = scmp.eq.s32.totalorder %s27, 0
    %p222 = por %p220, %p221
    %s223 = ssub.s32 %s29, %s36
    %p224 = scmp.eq.s32.totalorder %s223, 0
    %s226 = sadd.s32 %s225, 1
    %s227 = scalar_select %p224, %s225, %s226
    %p230 = pneg %p224
    %p231 = scmp.eq.s32.totalorder %s21, 3
    %p232 = por %p230, %p231
    %p233 = scmp.ne.s32.totalorder %s225, %s228
    %p234 = scmp.eq.s32.totalorder %s21, 0
    %p235 = por %p233, %p234
    %p236 = scmp.ne.s32.totalorder %s225, %s228
    %p237 = scmp.eq.s32.totalorder %s26, 3
    %p238 = por %p236, %p237
    %p239 = scmp.ne.s32.totalorder %s228, %s229
    %p240 = scmp.eq.s32.totalorder %s26, 0
    %p241 = por %p239, %p240
    %p242 = scmp.ne.s32.totalorder %s228, %s229
    %p243 = scmp.eq.s32.totalorder %s27, 3
    %p244 = por %p242, %p243
    %p246 = scmp.ne.s32.totalorder %s229, %s245
    %p247 = scmp.eq.s32.totalorder %s27, 0
    %p248 = por %p246, %p247
    %s249 = ssub.s32 %s29, %s36
    %p250 = scmp.eq.s32.totalorder %s249, 0
    %s252 = sadd.s32 %s251, 1
    %s253 = scalar_select %p250, %s251, %s252
    %p256 = pneg %p250
    %p257 = scmp.eq.s32.totalorder %s21, 3
    %p258 = por %p256, %p257
    %p259 = scmp.ne.s32.totalorder %s251, %s254
    %p260 = scmp.eq.s32.totalorder %s21, 0
    %p261 = por %p259, %p260
    %p262 = scmp.ne.s32.totalorder %s251, %s254
    %p263 = scmp.eq.s32.totalorder %s26, 3
    %p264 = por %p262, %p263
    %p265 = scmp.ne.s32.totalorder %s254, %s255
    %p266 = scmp.eq.s32.totalorder %s26, 0
    %p267 = por %p265, %p266
    %p268 = scmp.ne.s32.totalorder %s254, %s255
    %p269 = scmp.eq.s32.totalorder %s27, 3
    %p270 = por %p268, %p269
    %p272 = scmp.ne.s32.totalorder %s255, %s271
    %p273 = scmp.eq.s32.totalorder %s27, 0
    %p274 = por %p272, %p273
    %s275 = ssub.s32 %s29, %s36
    %p276 = scmp.eq.s32.totalorder %s275, 0
    %s278 = sadd.s32 %s277, 1
    %s279 = scalar_select %p276, %s277, %s278
    %p282 = pneg %p276
    %p283 = scmp.eq.s32.totalorder %s21, 3
    %p284 = por %p282, %p283
    %p285 = scmp.ne.s32.totalorder %s277, %s280
    %p286 = scmp.eq.s32.totalorder %s21, 0
    %p287 = por %p285, %p286
    %p288 = scmp.ne.s32.totalorder %s277, %s280
    %p289 = scmp.eq.s32.totalorder %s26, 3
    %p290 = por %p288, %p289
    %p291 = scmp.ne.s32.totalorder %s280, %s281
    %p292 = scmp.eq.s32.totalorder %s26, 0
    %p293 = por %p291, %p292
    %p294 = scmp.ne.s32.totalorder %s280, %s281
    %p295 = scmp.eq.s32.totalorder %s27, 3
    %p296 = por %p294, %p295
    %p298 = scmp.ne.s32.totalorder %s281, %s297
    %p299 = scmp.eq.s32.totalorder %s27, 0
    %p300 = por %p298, %p299
    %s301 = ssub.s32 %s29, %s36
    %p302 = scmp.eq.s32.totalorder %s301, 0
    %s304 = sadd.s32 %s303, 1
    %s305 = scalar_select %p302, %s303, %s304
    %p308 = pneg %p302
    %p309 = scmp.eq.s32.totalorder %s21, 3
    %p310 = por %p308, %p309
    %p311 = scmp.ne.s32.totalorder %s303, %s306
    %p312 = scmp.eq.s32.totalorder %s21, 0
    %p313 = por %p311, %p312
    %p314 = scmp.ne.s32.totalorder %s303, %s306
    %p315 = scmp.eq.s32.totalorder %s26, 3
    %p316 = por %p314, %p315
    %p317 = scmp.ne.s32.totalorder %s306, %s307
    %p318 = scmp.eq.s32.totalorder %s26, 0
    %p319 = por %p317, %p318
    %p320 = scmp.ne.s32.totalorder %s306, %s307
    %p321 = scmp.eq.s32.totalorder %s27, 3
    %p322 = por %p320, %p321
    %p324 = scmp.ne.s32.totalorder %s307, %s323
    %p325 = scmp.eq.s32.totalorder %s27, 0
    %p326 = por %p324, %p325
    %s327 = ssub.s32 %s29, %s36
    %p328 = scmp.eq.s32.totalorder %s327, 0
    %s330 = sadd.s32 %s329, 1
    %s331 = scalar_select %p328, %s329, %s330
    %p334 = pneg %p328
    %p335 = scmp.eq.s32.totalorder %s21, 3
    %p336 = por %p334, %p335
    %p337 = scmp.ne.s32.totalorder %s329, %s332
    %p338 = scmp.eq.s32.totalorder %s21, 0
    %p339 = por %p337, %p338
    %p340 = scmp.ne.s32.totalorder %s329, %s332
    %p341 = scmp.eq.s32.totalorder %s26, 3
    %p342 = por %p340, %p341
    %p343 = scmp.ne.s32.totalorder %s332, %s333
    %p344 = scmp.eq.s32.totalorder %s26, 0
    %p345 = por %p343, %p344
    %p346 = scmp.ne.s32.totalorder %s332, %s333
    %p347 = scmp.eq.s32.totalorder %s27, 3
    %p348 = por %p346, %p347
    %p350 = scmp.ne.s32.totalorder %s333, %s349
    %p351 = scmp.eq.s32.totalorder %s27, 0
    %p352 = por %p350, %p351
    %s353 = ssub.s32 %s29, %s36
    %p354 = scmp.eq.s32.totalorder %s353, 0
    %s356 = sadd.s32 %s355, 1
    %s357 = scalar_select %p354, %s355, %s356
    %p360 = pneg %p354
    %p361 = scmp.eq.s32.totalorder %s21, 3
    %p362 = por %p360, %p361
    %p363 = scmp.ne.s32.totalorder %s355, %s358
    %p364 = scmp.eq.s32.totalorder %s21, 0
    %p365 = por %p363, %p364
    %p366 = scmp.ne.s32.totalorder %s355, %s358
    %p367 = scmp.eq.s32.totalorder %s26, 3
    %p368 = por %p366, %p367
    %p369 = scmp.ne.s32.totalorder %s358, %s359
    %p370 = scmp.eq.s32.totalorder %s26, 0
    %p371 = por %p369, %p370
    %p372 = scmp.ne.s32.totalorder %s358, %s359
    %p373 = scmp.eq.s32.totalorder %s27, 3
    %p374 = por %p372, %p373
    %p376 = scmp.ne.s32.totalorder %s359, %s375
    %p377 = scmp.eq.s32.totalorder %s27, 0
    %p378 = por %p376, %p377
    %s379 = ssub.s32 %s29, %s36
    %s380 = ssub.s32 %s28, %s40
    %s381 = sor.u32 %s379, %s380
    %p382 = scmp.eq.s32.totalorder %s381, 0
    %s384 = sadd.s32 %s383, 1
    %s385 = scalar_select %p382, %s383, %s384
    %p388 = pneg %p382
    %p389 = scmp.eq.s32.totalorder %s21, 3
    %p390 = por %p388, %p389
    %p391 = scmp.ne.s32.totalorder %s383, %s386
    %p392 = scmp.eq.s32.totalorder %s21, 0
    %p393 = por %p391, %p392
    %p394 = scmp.ne.s32.totalorder %s383, %s386
    %p395 = scmp.eq.s32.totalorder %s26, 3
    %p396 = por %p394, %p395
    %p397 = scmp.ne.s32.totalorder %s386, %s387
    %p398 = scmp.eq.s32.totalorder %s26, 0
    %p399 = por %p397, %p398
    %p400 = scmp.ne.s32.totalorder %s386, %s387
    %p401 = scmp.eq.s32.totalorder %s27, 3
    %p402 = por %p400, %p401
    %p404 = scmp.ne.s32.totalorder %s387, %s403
    %p405 = scmp.eq.s32.totalorder %s27, 0
    %p406 = por %p404, %p405
    %s407 = ssub.s32 %s28, %s40
    %p408 = scmp.eq.s32.totalorder %s407, 0
    %s410 = sadd.s32 %s409, 1
    %s411 = scalar_select %p408, %s409, %s410
    %p414 = pneg %p408
    %p415 = scmp.eq.s32.totalorder %s21, 3
    %p416 = por %p414, %p415
    %p417 = scmp.ne.s32.totalorder %s409, %s412
    %p418 = scmp.eq.s32.totalorder %s21, 0
    %p419 = por %p417, %p418
    %p420 = scmp.ne.s32.totalorder %s409, %s412
    %p421 = scmp.eq.s32.totalorder %s26, 3
    %p422 = por %p420, %p421
    %p423 = scmp.ne.s32.totalorder %s412, %s413
    %p424 = scmp.eq.s32.totalorder %s26, 0
    %p425 = por %p423, %p424
    %p426 = scmp.ne.s32.totalorder %s412, %s413
    %p427 = scmp.eq.s32.totalorder %s27, 3
    %p428 = por %p426, %p427
    %p430 = scmp.ne.s32.totalorder %s413, %s429
    %p431 = scmp.eq.s32.totalorder %s27, 0
    %p432 = por %p430, %p431
    %p433 = scmp.le.s32.totalorder 1, %s21
    %p434 = scmp.lt.s32.totalorder %s21, 5
    %p435 = pnand %p433, %p434
    %p436 = pneg %p435
    // Predicated region
    $region9: #{transformer_forward.2} parent=5 // pred_check
      _
    $region10: #{transformer_forward.2} parent=5 // pred_check_branch
      %438 = sbr.rel (%p435) target = $region12
    $region11: #{transformer_forward.2} parent=5 // pred_region
      %s439 = ssub.s32 %s21, 1
    $region12: #{transformer_forward.2} parent=5 // pred_fallthru
      _
    %p440 = scmp.lt.s32.totalorder %s21, 4
    // Predicated region
    $region13: #{transformer_forward.2} parent=5 // pred_check
      %p441 = pneg %p440
    $region14: #{transformer_forward.2} parent=5 // pred_check_branch
      %443 = sbr.rel (%p441) target = $region16
    $region15: #{transformer_forward.2} parent=5 // pred_region
      // Predicated region
      $region17: #{transformer_forward.2} parent=15 // pred_check
        %p444 = pneg %p53
      $region18: #{transformer_forward.2} parent=15 // pred_check_branch
        %446 = sbr.rel (%p444) target = $region20
      $region19: #{transformer_forward.2} parent=15 // pred_region
        %p447 = scmp.lt.s32.totalorder %s28, 1
        %s448 = scalar_select %p447, %s28, 1
        %s449 = smul.addr %s448, 8
        %s450 = scalar_lea.vmem %s0, %s449
      $region20: #{transformer_forward.2} parent=15 // pred_fallthru
        _
      // Predicated region
      $region21: #{transformer_forward.2} parent=15 // pred_check
        %p451 = pneg %p79
      $region22: #{transformer_forward.2} parent=15 // pred_check_branch
        %453 = sbr.rel (%p451) target = $region24
      $region23: #{transformer_forward.2} parent=15 // pred_region
        %p454 = scmp.lt.s32.totalorder %s29, 1
        %s455 = scalar_select %p454, %s29, 1
        %s456 = smul.addr %s455, 4
        %s457 = smul.addr %s456, 4
        %s458 = scalar_lea.vmem %s1, %s457
      $region24: #{transformer_forward.2} parent=15 // pred_fallthru
        _
      // Predicated region
      $region25: #{transformer_forward.2} parent=15 // pred_check
        %p459 = pneg %p105
      $region26: #{transformer_forward.2} parent=15 // pred_check_branch
        %461 = sbr.rel (%p459) target = $region28
      $region27: #{transformer_forward.2} parent=15 // pred_region
        %p462 = scmp.lt.s32.totalorder %s29, 1
        %s463 = scalar_select %p462, %s29, 1
        %s464 = scalar_lea.vmem %s2, %s463
      $region28: #{transformer_forward.2} parent=15 // pred_fallthru
        _
      // Predicated region
      $region29: #{transformer_forward.2} parent=15 // pred_check
        %p465 = pneg %p131
      $region30: #{transformer_forward.2} parent=15 // pred_check_branch
        %467 = sbr.rel (%p465) target = $region32
      $region31: #{transformer_forward.2} parent=15 // pred_region
        %p468 = scmp.lt.s32.totalorder %s29, 1
        %s469 = scalar_select %p468, %s29, 1
        %s470 = smul.addr %s469, 4
        %s471 = smul.addr %s470, 4
        %s472 = scalar_lea.vmem %s3, %s471
      $region32: #{transformer_forward.2} parent=15 // pred_fallthru
        _
      // Predicated region
      $region33: #{transformer_forward.2} parent=15 // pred_check
        %p473 = pneg %p157
      $region34: #{transformer_forward.2} parent=15 // pred_check_branch
        %475 = sbr.rel (%p473) target = $region36
      $region35: #{transformer_forward.2} parent=15 // pred_region
        %p476 = scmp.lt.s32.totalorder %s29, 1
        %s477 = scalar_select %p476, %s29, 1
        %s478 = scalar_lea.vmem %s4, %s477
      $region36: #{transformer_forward.2} parent=15 // pred_fallthru
        _
      // Predicated region
      $region37: #{transformer_forward.2} parent=15 // pred_check
        %p479 = pneg %p183
      $region38: #{transformer_forward.2} parent=15 // pred_check_branch
        %481 = sbr.rel (%p479) target = $region40
      $region39: #{transformer_forward.2} parent=15 // pred_region
        %p482 = scmp.lt.s32.totalorder %s29, 1
        %s483 = scalar_select %p482, %s29, 1
        %s484 = scalar_lea.vmem %s5, %s483
      $region40: #{transformer_forward.2} parent=15 // pred_fallthru
        _
      // Predicated region
      $region41: #{transformer_forward.2} parent=15 // pred_check
        %p485 = pneg %p209
      $region42: #{transformer_forward.2} parent=15 // pred_check_branch
        %487 = sbr.rel (%p485) target = $region44
      $region43: #{transformer_forward.2} parent=15 // pred_region
        %p488 = scmp.lt.s32.totalorder %s29, 1
        %s489 = scalar_select %p488, %s29, 1
        %s490 = scalar_lea.vmem %s6, %s489
      $region44: #{transformer_forward.2} parent=15 // pred_fallthru
        _
      // Predicated region
      $region45: #{transformer_forward.2} parent=15 // pred_check
        %p491 = pneg %p235
      $region46: #{transformer_forward.2} parent=15 // pred_check_branch
        %493 = sbr.rel (%p491) target = $region48
      $region47: #{transformer_forward.2} parent=15 // pred_region
        %p494 = scmp.lt.s32.totalorder %s29, 1
        %s495 = scalar_select %p494, %s29, 1
        %s496 = scalar_lea.vmem %s7, %s495
      $region48: #{transformer_forward.2} parent=15 // pred_fallthru
        _
      // Predicated region
      $region49: #{transformer_forward.2} parent=15 // pred_check
        %p497 = pneg %p261
      $region50: #{transformer_forward.2} parent=15 // pred_check_branch
        %499 = sbr.rel (%p497) target = $region52
      $region51: #{transformer_forward.2} parent=15 // pred_region
        %p500 = scmp.lt.s32.totalorder %s29, 1
        %s501 = scalar_select %p500, %s29, 1
        %s502 = scalar_lea.vmem %s8, %s501
      $region52: #{transformer_forward.2} parent=15 // pred_fallthru
        _
      // Predicated region
      $region53: #{transformer_forward.2} parent=15 // pred_check
        %p503 = pneg %p287
      $region54: #{transformer_forward.2} parent=15 // pred_check_branch
        %505 = sbr.rel (%p503) target = $region56
      $region55: #{transformer_forward.2} parent=15 // pred_region
        %p506 = scmp.lt.s32.totalorder %s29, 1
        %s507 = scalar_select %p506, %s29, 1
        %s508 = smul.addr %s507, 4
        %s509 = smul.addr %s508, 4
        %s510 = scalar_lea.vmem %s9, %s509
      $region56: #{transformer_forward.2} parent=15 // pred_fallthru
        _
      // Predicated region
      $region57: #{transformer_forward.2} parent=15 // pred_check
        %p511 = pneg %p313
      $region58: #{transformer_forward.2} parent=15 // pred_check_branch
        %513 = sbr.rel (%p511) target = $region60
      $region59: #{transformer_forward.2} parent=15 // pred_region
        %p514 = scmp.lt.s32.totalorder %s29, 1
        %s515 = scalar_select %p514, %s29, 1
        %s516 = scalar_lea.vmem %s10, %s515
      $region60: #{transformer_forward.2} parent=15 // pred_fallthru
        _
      // Predicated region
      $region61: #{transformer_forward.2} parent=15 // pred_check
        %p517 = pneg %p339
      $region62: #{transformer_forward.2} parent=15 // pred_check_branch
        %519 = sbr.rel (%p517) target = $region64
      $region63: #{transformer_forward.2} parent=15 // pred_region
        %p520 = scmp.lt.s32.totalorder %s29, 1
        %s521 = scalar_select %p520, %s29, 1
        %s522 = smul.addr %s521, 8
        %s523 = smul.addr %s522, 4
        %s524 = scalar_lea.vmem %s11, %s523
      $region64: #{transformer_forward.2} parent=15 // pred_fallthru
        _
      // Predicated region
      $region65: #{transformer_forward.2} parent=15 // pred_check
        %p525 = pneg %p365
      $region66: #{transformer_forward.2} parent=15 // pred_check_branch
        %527 = sbr.rel (%p525) target = $region68
      $region67: #{transformer_forward.2} parent=15 // pred_region
        %p528 = scmp.lt.s32.totalorder %s29, 1
        %s529 = scalar_select %p528, %s29, 1
        %s530 = scalar_lea.vmem %s12, %s529
      $region68: #{transformer_forward.2} parent=15 // pred_fallthru
        _
    $region16: #{transformer_forward.2} parent=5 // pred_fallthru
      _
    %p531 = scmp.le.s32.totalorder 1, %s21
    %p532 = scmp.lt.s32.totalorder %s21, 5
    %p533 = pnand %p531, %p532
    %p534 = pneg %p533
    // Predicated region
    $region69: #{transformer_forward.2} parent=5 // pred_check
      _
    $region70: #{transformer_forward.2} parent=5 // pred_check_branch
      %536 = sbr.rel (%p533) target = $region72
    $region71: #{transformer_forward.2} parent=5 // pred_region
      %s537 = ssub.s32 %s21, 1
      %p538 = scmp.lt.s32.totalorder %s30, 1
      %s539 = scalar_select %p538, %s30, 1
      %s540 = smul.addr %s539, 8
      %s541 = scalar_lea.vmem %s0, %s540
      %p542 = pneg %p59
      %p543 = pneg %p56
      %p544 = scmp.lt.s32.totalorder %s31, 1
      %s545 = scalar_select %p544, %s31, 1
      %s546 = smul.addr %s545, 4
      %s547 = smul.addr %s546, 4
      %s548 = scalar_lea.vmem %s1, %s547
      %p549 = pneg %p85
      %p550 = pneg %p82
      %p551 = scmp.lt.s32.totalorder %s31, 1
      %s552 = scalar_select %p551, %s31, 1
      %s553 = scalar_lea.vmem %s2, %s552
      %p554 = pneg %p111
      %p555 = pneg %p108
      %p556 = scmp.lt.s32.totalorder %s31, 1
      %s557 = scalar_select %p556, %s31, 1
      %s558 = smul.addr %s557, 4
      %s559 = smul.addr %s558, 4
      %s560 = scalar_lea.vmem %s3, %s559
      %p561 = pneg %p137
      %p562 = pneg %p134
      %p563 = scmp.lt.s32.totalorder %s31, 1
      %s564 = scalar_select %p563, %s31, 1
      %s565 = scalar_lea.vmem %s4, %s564
      %p566 = pneg %p163
      %p567 = pneg %p160
      %p568 = scmp.lt.s32.totalorder %s31, 1
      %s569 = scalar_select %p568, %s31, 1
      %s570 = scalar_lea.vmem %s5, %s569
      %p571 = pneg %p189
      %p572 = pneg %p186
      %p573 = scmp.lt.s32.totalorder %s31, 1
      %s574 = scalar_select %p573, %s31, 1
      %s575 = scalar_lea.vmem %s6, %s574
      %p576 = pneg %p215
      %p577 = pneg %p212
      %p578 = scmp.lt.s32.totalorder %s31, 1
      %s579 = scalar_select %p578, %s31, 1
      %s580 = scalar_lea.vmem %s7, %s579
      %p581 = pneg %p241
      %p582 = pneg %p238
      %p583 = scmp.lt.s32.totalorder %s31, 1
      %s584 = scalar_select %p583, %s31, 1
      %s585 = scalar_lea.vmem %s8, %s584
      %p586 = pneg %p267
      %p587 = pneg %p264
      %p588 = scmp.lt.s32.totalorder %s31, 1
      %s589 = scalar_select %p588, %s31, 1
      %s590 = smul.addr %s589, 4
      %s591 = smul.addr %s590, 4
      %s592 = scalar_lea.vmem %s9, %s591
      %p593 = pneg %p293
      %p594 = pneg %p290
      %p595 = scmp.lt.s32.totalorder %s31, 1
      %s596 = scalar_select %p595, %s31, 1
      %s597 = scalar_lea.vmem %s10, %s596
      %p598 = pneg %p319
      %p599 = pneg %p316
      %p600 = scmp.lt.s32.totalorder %s31, 1
      %s601 = scalar_select %p600, %s31, 1
      %s602 = smul.addr %s601, 8
      %s603 = smul.addr %s602, 4
      %s604 = scalar_lea.vmem %s11, %s603
      %p605 = pneg %p345
      %p606 = pneg %p342
      %p607 = scmp.lt.s32.totalorder %s31, 1
      %s608 = scalar_select %p607, %s31, 1
      %s609 = scalar_lea.vmem %s12, %s608
      %p610 = pneg %p371
      %p611 = pneg %p368
      %p612 = pneg %p399
      %p613 = pneg %p396
      %p614 = scmp.lt.s32.totalorder %s31, 1
      %s615 = scalar_select %p614, %s31, 1
      %p616 = scmp.lt.s32.totalorder %s30, 1
      %s617 = scalar_select %p616, %s30, 1
      %s618 = smul.addr %s615, 2
      %s619 = sadd.s32 %s617, %s618
      %s620 = smul.addr %s619, 8
      %s621 = scalar_lea.vmem %s13, %s620
      %p622 = pneg %p425
      %p623 = pneg %p422
      %p624 = scmp.lt.s32.totalorder %s30, 1
      %s625 = scalar_select %p624, %s30, 1
      %s626 = smul.addr %s625, 8
      %s627 = scalar_lea.vmem %s14, %s626
      %p628 = scmp.lt.s32.totalorder %s30, 1
      %s629 = scalar_select %p628, %s30, 1
      %s630 = smul.addr %s629, 8
      %s631 = scalar_lea.vmem %s0, %s630
      %p632 = scmp.lt.s32.totalorder %s31, 1
      %s633 = scalar_select %p632, %s31, 1
      %s634 = smul.addr %s633, 4
      %s635 = smul.addr %s634, 4
      %s636 = scalar_lea.vmem %s1, %s635
      %p637 = scmp.lt.s32.totalorder %s31, 1
      %s638 = scalar_select %p637, %s31, 1
      %s639 = scalar_lea.vmem %s2, %s638
      %p640 = scmp.lt.s32.totalorder %s31, 1
      %s641 = scalar_select %p640, %s31, 1
      %s642 = smul.addr %s641, 4
      %s643 = smul.addr %s642, 4
      %s644 = scalar_lea.vmem %s3, %s643
      %p645 = scmp.lt.s32.totalorder %s31, 1
      %s646 = scalar_select %p645, %s31, 1
      %s647 = scalar_lea.vmem %s4, %s646
      %p648 = scmp.lt.s32.totalorder %s31, 1
      %s649 = scalar_select %p648, %s31, 1
      %s650 = scalar_lea.vmem %s5, %s649
      %p651 = scmp.lt.s32.totalorder %s31, 1
      %s652 = scalar_select %p651, %s31, 1
      %s653 = scalar_lea.vmem %s6, %s652
      %p654 = scmp.lt.s32.totalorder %s31, 1
      %s655 = scalar_select %p654, %s31, 1
      %s656 = scalar_lea.vmem %s7, %s655
      %p657 = scmp.lt.s32.totalorder %s31, 1
      %s658 = scalar_select %p657, %s31, 1
      %s659 = scalar_lea.vmem %s8, %s658
      %p660 = scmp.lt.s32.totalorder %s31, 1
      %s661 = scalar_select %p660, %s31, 1
      %s662 = smul.addr %s661, 4
      %s663 = smul.addr %s662, 4
      %s664 = scalar_lea.vmem %s9, %s663
      %p665 = scmp.lt.s32.totalorder %s31, 1
      %s666 = scalar_select %p665, %s31, 1
      %s667 = scalar_lea.vmem %s10, %s666
      %p668 = scmp.lt.s32.totalorder %s31, 1
      %s669 = scalar_select %p668, %s31, 1
      %s670 = smul.addr %s669, 8
      %s671 = smul.addr %s670, 4
      %s672 = scalar_lea.vmem %s11, %s671
      %p673 = scmp.lt.s32.totalorder %s31, 1
      %s674 = scalar_select %p673, %s31, 1
      %s675 = scalar_lea.vmem %s12, %s674
      %p676 = scmp.lt.s32.totalorder %s31, 1
      %s677 = scalar_select %p676, %s31, 1
      %p678 = scmp.lt.s32.totalorder %s30, 1
      %s679 = scalar_select %p678, %s30, 1
      %s680 = smul.addr %s677, 2
      %s681 = sadd.s32 %s679, %s680
      %s682 = smul.addr %s681, 8
      %s683 = scalar_lea.vmem %s13, %s682
      %p684 = scmp.lt.s32.totalorder %s30, 1
      %s685 = scalar_select %p684, %s30, 1
      %s686 = smul.addr %s685, 8
      %s687 = scalar_lea.vmem %s14, %s686
      %p689 = scmp.eq.s32.totalorder %s31, 0
      // Predicated region
      $region73: #{transformer_forward.2} parent=71 // pred_check
        %p690 = pneg %p689
      $region74: #{transformer_forward.2} parent=71 // pred_check_branch
        %692 = sbr.rel (%p690) target = $region76
      $region75: #{transformer_forward.2} parent=71 // pred_region
        %v693 = vld [vmem:[%s631] sm:$0xff]
        %vm694 = vcmask 261120
        %695 = vst.msk [vmem:[#allocation2] sm:$0xff] %vm694, %v693
      $region76: #{transformer_forward.2} parent=71 // pred_fallthru
        _
      %v696 = vld [vmem:[#allocation2] sm:$0xff]
      %v697 = vld [vmem:[%s636] sm:$0xf]
      %v698 = vld [vmem:[%s636 + $0x4] sm:$0xf]
      %v699 = vld [vmem:[%s636 + $0x8] sm:$0xf]
      %v700 = vld [vmem:[%s636 + $0xc] sm:$0xf]
      %v701 = vpack.c.bf16 %v696, %v696
      %v702 = vld [vmem:[%s639] sm:$0x1]
      %v704 = vlaneseq
      %v705 = vshrl.u32 %v704, 7
      %v706 = vsub.s32 0, %v705
      %v707 = vrot.slane %v702, %v706
      %v713 = vunpack.c.l.b16 %v697
      %v714 = vunpack.c.l.b16 %v698
      %v715 = vunpack.c.l.b16 %v699
      %v716 = vunpack.c.l.b16 %v700
      %v717 = vpack.c.b16 %v714, %v713
      %v718 = vpack.c.b16 %v716, %v715
      %vm721 = vcmask 261120
      %v723 = vsel %vm721, %v701, 0
      %725 = vmatprep.subr.bf16.mxu0 0
      %726 = vmatpush1.bf16.msra.mxu0 0
      %727 = vmatprep.subr.bf16.mxu0 0
      %728 = vmatpush1.bf16.msra.mxu0 0
      %729 = vmatprep.subr.bf16.mxu0 0
      %730 = vmatpush1.bf16.msra.mxu0 0
      %731 = vmatprep.subr.bf16.mxu0 0
      %732 = vmatpush1.bf16.msra.mxu0 0
      %733 = vmatprep.subr.bf16.mxu0 0
      %734 = vmatpush1.bf16.msra.mxu0 0
      %735 = vmatprep.subr.bf16.mxu0 0
      %736 = vmatpush1.bf16.msra.mxu0 0
      %737 = vmatprep.subr.bf16.mxu0 0
      %738 = vmatpush1.bf16.msra.mxu0 %v718
      %739 = vmatprep.subr.bf16.mxu0 0
      %740 = vmatpush1.bf16.msra.mxu0 %v717
      %741 = vmatprep.subr.bf16.mxu0 0
      %742 = vmatpush2.bf16.msra.mxu0 0
      %743 = vmatprep.subr.bf16.mxu0 0
      %744 = vmatpush2.bf16.msra.mxu0 0
      %745 = vmatprep.subr.bf16.mxu0 0
      %746 = vmatpush2.bf16.msra.mxu0 0
      %747 = vmatprep.subr.bf16.mxu0 0
      %748 = vmatpush2.bf16.msra.mxu0 0
      %749 = vmatprep.subr.bf16.mxu0 0
      %750 = vmatpush2.bf16.msra.mxu0 0
      %751 = vmatprep.subr.bf16.mxu0 0
      %752 = vmatpush2.bf16.msra.mxu0 0
      %753 = vmatprep.subr.bf16.mxu0 0
      %754 = vmatpush2.bf16.msra.mxu0 0
      %755 = vmatprep.subr.bf16.mxu0 0
      %756 = vmatpush2.bf16.msra.mxu0 0
      %757 = vmatprep.mubr.bf16.mxu0 0
      %758 = vmatmul.mubr.bf16.gmra.mxu0 %v723
      %v759 = vpop.f32.mrf.mxu0
      %v760 = vadd.f32 %v707, %v759
      %v761 = vpop.f32.mrf.mxu0
      %v762 = vpop.f32.mrf.mxu0
      %v763 = vpop.f32.mrf.mxu0
      %764 = vdwg.mxu0
      %v765 = vmul.f32 %v760, 0.17677669
      %v766 = vpack.c.bf16 %v765, %v765
      %v767 = vpack.c.bf16 %v760, %v760
      %769 = vrot.lane.b32.xlu0 %v767, 96
      %v770 = vpop.permute.xlu0 %769
      %v772 = vsel %vm721, %v766, 0
      %v775 = vsel %vm721, %v770, 0
      %777 = vmatprep.subr.bf16.mxu0 0
      %778 = vmatpush1.bf16.xpose.msra.mxu0 0
      %779 = vmatprep.subr.bf16.mxu0 0
      %780 = vmatpush1.bf16.xpose.msra.mxu0 0
      %781 = vmatprep.subr.bf16.mxu0 0
      %782 = vmatpush1.bf16.xpose.msra.mxu0 0
      %783 = vmatprep.subr.bf16.mxu0 0
      %784 = vmatpush1.bf16.xpose.msra.mxu0 0
      %785 = vmatprep.subr.bf16.mxu0 0
      %786 = vmatpush1.bf16.xpose.msra.mxu0 0
      %787 = vmatprep.subr.bf16.mxu0 0
      %788 = vmatpush1.bf16.xpose.msra.mxu0 0
      %789 = vmatprep.subr.bf16.mxu0 0
      %790 = vmatpush1.bf16.xpose.msra.mxu0 0
      %791 = vmatprep.subr.bf16.mxu0 0
      %792 = vmatpush1.bf16.xpose.msra.mxu0 %v775
      %793 = vmatprep.subr.bf16.mxu0 0
      %794 = vmatpush2.bf16.xpose.msra.mxu0 0
      %795 = vmatprep.subr.bf16.mxu0 0
      %796 = vmatpush2.bf16.xpose.msra.mxu0 0
      %797 = vmatprep.subr.bf16.mxu0 0
      %798 = vmatpush2.bf16.xpose.msra.mxu0 0
      %799 = vmatprep.subr.bf16.mxu0 0
      %800 = vmatpush2.bf16.xpose.msra.mxu0 0
      %801 = vmatprep.subr.bf16.mxu0 0
      %802 = vmatpush2.bf16.xpose.msra.mxu0 0
      %803 = vmatprep.subr.bf16.mxu0 0
      %804 = vmatpush2.bf16.xpose.msra.mxu0 0
      %805 = vmatprep.subr.bf16.mxu0 0
      %806 = vmatpush2.bf16.xpose.msra.mxu0 0
      %807 = vmatprep.subr.bf16.mxu0 0
      %808 = vmatpush2.bf16.xpose.msra.mxu0 0
      %809 = vmatprep.mubr.bf16.mxu0 0
      %810 = vmatmul.mubr.bf16.gmra.mxu0 %v772
      %v811 = vpop.f32.mrf.mxu0
      %v812 = vadd.f32 0.0, %v811
      %v813 = vpop.f32.mrf.mxu0
      %v814 = vpop.f32.mrf.mxu0
      %v815 = vpop.f32.mrf.mxu0
      %816 = vdwg.mxu0
      %vm817 = vcmask 64512
      %v818 = vsel %vm817, %v812, -inf
      %819 = vmax.xlane.f32.xlu0 %v818
      %v820 = vpop.xlane.xlu0 %819
      %v821 = vsub.f32 %v812, %v820
      %v822 = vmul.f32 %v821, 1.442695
      %v823 = vpow.pop %v822
      %v824 = vsel %vm817, %v823, 0.0
      %825 = vadd.xlane.f32.xlu0 %v824
      %v826 = vpop.xlane.xlu0 %825
      %v827 = vrcp.pop %v826
      %v828 = vmul.f32 %v823, %v827
      %829 = vst.msk [vmem:[%s683] sm:$0xff] %vm817, %v828
      %v830 = vpack.c.bf16 %v828, %v828
      %831 = vrot.lane.b32.xlu0 %v767, 64
      %v832 = vpop.permute.xlu0 %831
      %v834 = vsel %vm817, %v830, 0
      %vm836 = vcmask 1043456
      %v838 = vsel %vm836, %v832, 0
      %840 = vmatprep.subr.bf16.mxu0 0
      %841 = vmatpush1.bf16.msra.mxu0 0
      %842 = vmatprep.subr.bf16.mxu0 0
      %843 = vmatpush1.bf16.msra.mxu0 0
      %844 = vmatprep.subr.bf16.mxu0 0
      %845 = vmatpush1.bf16.msra.mxu0 0
      %846 = vmatprep.subr.bf16.mxu0 0
      %847 = vmatpush1.bf16.msra.mxu0 0
      %848 = vmatprep.subr.bf16.mxu0 0
      %849 = vmatpush1.bf16.msra.mxu0 0
      %850 = vmatprep.subr.bf16.mxu0 0
      %851 = vmatpush1.bf16.msra.mxu0 0
      %852 = vmatprep.subr.bf16.mxu0 0
      %853 = vmatpush1.bf16.msra.mxu0 0
      %854 = vmatprep.subr.bf16.mxu0 0
      %855 = vmatpush1.bf16.msra.mxu0 %v838
      %856 = vmatprep.subr.bf16.mxu0 0
      %857 = vmatpush2.bf16.msra.mxu0 0
      %858 = vmatprep.subr.bf16.mxu0 0
      %859 = vmatpush2.bf16.msra.mxu0 0
      %860 = vmatprep.subr.bf16.mxu0 0
      %861 = vmatpush2.bf16.msra.mxu0 0
      %862 = vmatprep.subr.bf16.mxu0 0
      %863 = vmatpush2.bf16.msra.mxu0 0
      %864 = vmatprep.subr.bf16.mxu0 0
      %865 = vmatpush2.bf16.msra.mxu0 0
      %866 = vmatprep.subr.bf16.mxu0 0
      %867 = vmatpush2.bf16.msra.mxu0 0
      %868 = vmatprep.subr.bf16.mxu0 0
      %869 = vmatpush2.bf16.msra.mxu0 0
      %870 = vmatprep.subr.bf16.mxu0 0
      %871 = vmatpush2.bf16.msra.mxu0 0
      %872 = vmatprep.mubr.bf16.mxu0 0
      %873 = vmatmul.mubr.bf16.gmra.mxu0 %v834
      %v874 = vpop.f32.mrf.mxu0
      %v875 = vadd.f32 0.0, %v874
      %v876 = vpop.f32.mrf.mxu0
      %v877 = vpop.f32.mrf.mxu0
      %v878 = vpop.f32.mrf.mxu0
      %879 = vdwg.mxu0
      %v880 = vld [vmem:[%s644] sm:$0xf]
      %v881 = vld [vmem:[%s644 + $0x4] sm:$0xf]
      %v882 = vld [vmem:[%s644 + $0x8] sm:$0xf]
      %v883 = vld [vmem:[%s644 + $0xc] sm:$0xf]
      %v884 = vpack.c.bf16 %v875, %v875
      %v885 = vld [vmem:[%s647] sm:$0x1]
      %v887 = vlaneseq
      %v888 = vshrl.u32 %v887, 7
      %v889 = vsub.s32 0, %v888
      %v890 = vrot.slane %v885, %v889
      %v896 = vunpack.c.l.b16 %v880
      %v897 = vunpack.c.l.b16 %v881
      %v898 = vunpack.c.l.b16 %v882
      %v899 = vunpack.c.l.b16 %v883
      %v900 = vpack.c.b16 %v897, %v896
      %v901 = vpack.c.b16 %v899, %v898
      %v905 = vsel %vm721, %v884, 0
      %907 = vmatprep.subr.bf16.mxu0 0
      %908 = vmatpush1.bf16.msra.mxu0 0
      %909 = vmatprep.subr.bf16.mxu0 0
      %910 = vmatpush1.bf16.msra.mxu0 0
      %911 = vmatprep.subr.bf16.mxu0 0
      %912 = vmatpush1.bf16.msra.mxu0 0
      %913 = vmatprep.subr.bf16.mxu0 0
      %914 = vmatpush1.bf16.msra.mxu0 0
      %915 = vmatprep.subr.bf16.mxu0 0
      %916 = vmatpush1.bf16.msra.mxu0 0
      %917 = vmatprep.subr.bf16.mxu0 0
      %918 = vmatpush1.bf16.msra.mxu0 0
      %919 = vmatprep.subr.bf16.mxu0 0
      %920 = vmatpush1.bf16.msra.mxu0 %v901
      %921 = vmatprep.subr.bf16.mxu0 0
      %922 = vmatpush1.bf16.msra.mxu0 %v900
      %923 = vmatprep.subr.bf16.mxu0 0
      %924 = vmatpush2.bf16.msra.mxu0 0
      %925 = vmatprep.subr.bf16.mxu0 0
      %926 = vmatpush2.bf16.msra.mxu0 0
      %927 = vmatprep.subr.bf16.mxu0 0
      %928 = vmatpush2.bf16.msra.mxu0 0
      %929 = vmatprep.subr.bf16.mxu0 0
      %930 = vmatpush2.bf16.msra.mxu0 0
      %931 = vmatprep.subr.bf16.mxu0 0
      %932 = vmatpush2.bf16.msra.mxu0 0
      %933 = vmatprep.subr.bf16.mxu0 0
      %934 = vmatpush2.bf16.msra.mxu0 0
      %935 = vmatprep.subr.bf16.mxu0 0
      %936 = vmatpush2.bf16.msra.mxu0 0
      %937 = vmatprep.subr.bf16.mxu0 0
      %938 = vmatpush2.bf16.msra.mxu0 0
      %939 = vmatprep.mubr.bf16.mxu0 0
      %940 = vmatmul.mubr.bf16.gmra.mxu0 %v905
      %v941 = vpop.f32.mrf.mxu0
      %v942 = vadd.f32 %v890, %v941
      %v943 = vpop.f32.mrf.mxu0
      %v944 = vpop.f32.mrf.mxu0
      %v945 = vpop.f32.mrf.mxu0
      %946 = vdwg.mxu0
      %v947 = vadd.f32 %v696, %v942
      %v948 = vld [vmem:[%s650] sm:$0x1]
      %v949 = vld [vmem:[%s653] sm:$0x1]
      %v950 = vsel %vm721, %v947, 0.0
      %951 = vadd.xlane.f32.xlu0 %v950
      %v952 = vpop.xlane.xlu0 %951
      %v953 = vrcp.pop 32.0
      %v954 = vmul.f32 %v952, %v953
      %v955 = vsub.f32 %v947, %v954
      %v956 = vmul.f32 %v955, %v955
      %v957 = vsel %vm721, %v956, 0.0
      %958 = vadd.xlane.f32.xlu0 %v957
      %v959 = vpop.xlane.xlu0 %958
      %v960 = vmul.f32 %v959, %v953
      %v961 = vadd.f32 %v960, 1e-05
      %v962 = vrsqrt.pop %v961
      %v963 = vmul.f32 %v955, %v962
      %v965 = vlaneseq
      %v966 = vshrl.u32 %v965, 7
      %v967 = vsub.s32 0, %v966
      %v968 = vrot.slane %v948, %v967
      %v970 = vmul.f32 %v963, %v968
      %v972 = vlaneseq
      %v973 = vshrl.u32 %v972, 7
      %v974 = vsub.s32 0, %v973
      %v975 = vrot.slane %v949, %v974
      %v977 = vadd.f32 %v970, %v975
      %v978 = vld [vmem:[%s664] sm:$0xf]
      %v979 = vld [vmem:[%s664 + $0x4] sm:$0xf]
      %v980 = vld [vmem:[%s664 + $0x8] sm:$0xf]
      %v981 = vld [vmem:[%s664 + $0xc] sm:$0xf]
      %v982 = vpack.c.bf16 %v977, %v977
      %v983 = vld [vmem:[%s667] sm:$0x1]
      %v985 = vlaneseq
      %v986 = vshrl.u32 %v985, 7
      %v987 = vsub.s32 0, %v986
      %v988 = vrot.slane %v983, %v987
      %v994 = vunpack.c.l.b16 %v978
      %v995 = vunpack.c.l.b16 %v979
      %v996 = vunpack.c.l.b16 %v980
      %v997 = vunpack.c.l.b16 %v981
      %v998 = vpack.c.b16 %v995, %v994
      %v999 = vpack.c.b16 %v997, %v996
      %v1003 = vsel %vm721, %v982, 0
      %1005 = vmatprep.subr.bf16.mxu0 0
      %1006 = vmatpush1.bf16.msra.mxu0 0
      %1007 = vmatprep.subr.bf16.mxu0 0
      %1008 = vmatpush1.bf16.msra.mxu0 0
      %1009 = vmatprep.subr.bf16.mxu0 0
      %1010 = vmatpush1.bf16.msra.mxu0 0
      %1011 = vmatprep.subr.bf16.mxu0 0
      %1012 = vmatpush1.bf16.msra.mxu0 0
      %1013 = vmatprep.subr.bf16.mxu0 0
      %1014 = vmatpush1.bf16.msra.mxu0 0
      %1015 = vmatprep.subr.bf16.mxu0 0
      %1016 = vmatpush1.bf16.msra.mxu0 0
      %1017 = vmatprep.subr.bf16.mxu0 0
      %1018 = vmatpush1.bf16.msra.mxu0 %v999
      %1019 = vmatprep.subr.bf16.mxu0 0
      %1020 = vmatpush1.bf16.msra.mxu0 %v998
      %1021 = vmatprep.subr.bf16.mxu0 0
      %1022 = vmatpush2.bf16.msra.mxu0 0
      %1023 = vmatprep.subr.bf16.mxu0 0
      %1024 = vmatpush2.bf16.msra.mxu0 0
      %1025 = vmatprep.subr.bf16.mxu0 0
      %1026 = vmatpush2.bf16.msra.mxu0 0
      %1027 = vmatprep.subr.bf16.mxu0 0
      %1028 = vmatpush2.bf16.msra.mxu0 0
      %1029 = vmatprep.subr.bf16.mxu0 0
      %1030 = vmatpush2.bf16.msra.mxu0 0
      %1031 = vmatprep.subr.bf16.mxu0 0
      %1032 = vmatpush2.bf16.msra.mxu0 0
      %1033 = vmatprep.subr.bf16.mxu0 0
      %1034 = vmatpush2.bf16.msra.mxu0 0
      %1035 = vmatprep.subr.bf16.mxu0 0
      %1036 = vmatpush2.bf16.msra.mxu0 0
      %1037 = vmatprep.mubr.bf16.mxu0 0
      %1038 = vmatmul.mubr.bf16.gmra.mxu0 %v1003
      %v1039 = vpop.f32.mrf.mxu0
      %v1040 = vadd.f32 %v988, %v1039
      %v1041 = vpop.f32.mrf.mxu0
      %v1042 = vpop.f32.mrf.mxu0
      %v1043 = vpop.f32.mrf.mxu0
      %1044 = vdwg.mxu0
      %v1045 = vmax.f32 %v1040, 0.0
      %v1046 = vld [vmem:[%s672] sm:$0xf]
      %v1047 = vld [vmem:[%s672 + $0x4] sm:$0xf]
      %v1048 = vld [vmem:[%s672 + $0x8] sm:$0xf]
      %v1049 = vld [vmem:[%s672 + $0xc] sm:$0xf]
      %v1050 = vld [vmem:[%s672 + $0x10] sm:$0xf]
      %v1051 = vld [vmem:[%s672 + $0x14] sm:$0xf]
      %v1052 = vld [vmem:[%s672 + $0x18] sm:$0xf]
      %v1053 = vld [vmem:[%s672 + $0x1c] sm:$0xf]
      %v1054 = vpack.c.bf16 %v1045, %v1045
      %v1055 = vld [vmem:[%s675] sm:$0x1]
      %v1057 = vlaneseq
      %v1058 = vshrl.u32 %v1057, 7
      %v1059 = vsub.s32 0, %v1058
      %v1060 = vrot.slane %v1055, %v1059
      %v1070 = vunpack.c.l.b16 %v1046
      %v1071 = vunpack.c.l.b16 %v1047
      %v1072 = vunpack.c.l.b16 %v1048
      %v1073 = vunpack.c.l.b16 %v1049
      %v1074 = vunpack.c.l.b16 %v1050
      %v1075 = vunpack.c.l.b16 %v1051
      %v1076 = vunpack.c.l.b16 %v1052
      %v1077 = vunpack.c.l.b16 %v1053
      %v1078 = vpack.c.b16 %v1071, %v1070
      %v1079 = vpack.c.b16 %v1073, %v1072
      %v1080 = vpack.c.b16 %v1075, %v1074
      %v1081 = vpack.c.b16 %v1077, %v1076
      %vm1086 = vcmask 523264
      %v1088 = vsel %vm1086, %v1054, 0
      %1090 = vmatprep.subr.bf16.mxu0 0
      %1091 = vmatpush1.bf16.msra.mxu0 0
      %1092 = vmatprep.subr.bf16.mxu0 0
      %1093 = vmatpush1.bf16.msra.mxu0 0
      %1094 = vmatprep.subr.bf16.mxu0 0
      %1095 = vmatpush1.bf16.msra.mxu0 0
      %1096 = vmatprep.subr.bf16.mxu0 0
      %1097 = vmatpush1.bf16.msra.mxu0 0
      %1098 = vmatprep.subr.bf16.mxu0 0
      %1099 = vmatpush1.bf16.msra.mxu0 %v1081
      %1100 = vmatprep.subr.bf16.mxu0 0
      %1101 = vmatpush1.bf16.msra.mxu0 %v1080
      %1102 = vmatprep.subr.bf16.mxu0 0
      %1103 = vmatpush1.bf16.msra.mxu0 %v1079
      %1104 = vmatprep.subr.bf16.mxu0 0
      %1105 = vmatpush1.bf16.msra.mxu0 %v1078
      %1106 = vmatprep.subr.bf16.mxu0 0
      %1107 = vmatpush2.bf16.msra.mxu0 0
      %1108 = vmatprep.subr.bf16.mxu0 0
      %1109 = vmatpush2.bf16.msra.mxu0 0
      %1110 = vmatprep.subr.bf16.mxu0 0
      %1111 = vmatpush2.bf16.msra.mxu0 0
      %1112 = vmatprep.subr.bf16.mxu0 0
      %1113 = vmatpush2.bf16.msra.mxu0 0
      %1114 = vmatprep.subr.bf16.mxu0 0
      %1115 = vmatpush2.bf16.msra.mxu0 0
      %1116 = vmatprep.subr.bf16.mxu0 0
      %1117 = vmatpush2.bf16.msra.mxu0 0
      %1118 = vmatprep.subr.bf16.mxu0 0
      %1119 = vmatpush2.bf16.msra.mxu0 0
      %1120 = vmatprep.subr.bf16.mxu0 0
      %1121 = vmatpush2.bf16.msra.mxu0 0
      %1122 = vmatprep.mubr.bf16.mxu0 0
      %1123 = vmatmul.mubr.bf16.gmra.mxu0 %v1088
      %v1124 = vpop.f32.mrf.mxu0
      %v1125 = vadd.f32 %v1060, %v1124
      %v1126 = vpop.f32.mrf.mxu0
      %v1127 = vpop.f32.mrf.mxu0
      %v1128 = vpop.f32.mrf.mxu0
      %1129 = vdwg.mxu0
      %v1130 = vadd.f32 %v977, %v1125
      %v1131 = vld [vmem:[%s656] sm:$0x1]
      %v1132 = vld [vmem:[%s659] sm:$0x1]
      %v1133 = vsel %vm721, %v1130, 0.0
      %1134 = vadd.xlane.f32.xlu0 %v1133
      %v1135 = vpop.xlane.xlu0 %1134
      %v1136 = vmul.f32 %v1135, %v953
      %v1137 = vsub.f32 %v1130, %v1136
      %v1138 = vmul.f32 %v1137, %v1137
      %v1139 = vsel %vm721, %v1138, 0.0
      %1140 = vadd.xlane.f32.xlu0 %v1139
      %v1141 = vpop.xlane.xlu0 %1140
      %v1142 = vmul.f32 %v1141, %v953
      %v1143 = vadd.f32 %v1142, 1e-05
      %v1144 = vrsqrt.pop %v1143
      %v1145 = vmul.f32 %v1137, %v1144
      %v1147 = vlaneseq
      %v1148 = vshrl.u32 %v1147, 7
      %v1149 = vsub.s32 0, %v1148
      %v1150 = vrot.slane %v1131, %v1149
      %v1152 = vmul.f32 %v1145, %v1150
      %v1154 = vlaneseq
      %v1155 = vshrl.u32 %v1154, 7
      %v1156 = vsub.s32 0, %v1155
      %v1157 = vrot.slane %v1132, %v1156
      %v1159 = vadd.f32 %v1152, %v1157
      %1160 = vst.msk [vmem:[#allocation2] sm:$0xff] %vm721, %v1159
      %1161 = vst.msk [vmem:[%s687] sm:$0xff] %vm721, %v1159
      %p1162 = scmp.lt.s32.totalorder %s31, 1
      %s1163 = scalar_select %p1162, %s31, 1
      %p1164 = scmp.lt.s32.totalorder %s30, 1
      %s1165 = scalar_select %p1164, %s30, 1
      %s1166 = smul.addr %s1163, 2
      %s1167 = sadd.s32 %s1165, %s1166
      %s1168 = smul.addr %s1167, 8
      %s1169 = scalar_lea.vmem %s13, %s1168
      %p1170 = scmp.lt.s32.totalorder %s30, 1
      %s1171 = scalar_select %p1170, %s30, 1
      %s1172 = smul.addr %s1171, 8
      %s1173 = scalar_lea.vmem %s14, %s1172
      // Predicated region
      $region77: #{transformer_forward.2} parent=71 // pred_check
        %p1174 = pneg %p396
      $region78: #{transformer_forward.2} parent=71 // pred_check_branch
        %1176 = sbr.rel (%p1174) target = $region80
      $region79: #{transformer_forward.2} parent=71 // pred_region
        _
      $region80: #{transformer_forward.2} parent=71 // pred_fallthru
        _
      // Predicated region
      $region81: #{transformer_forward.2} parent=71 // pred_check
        %p1177 = pneg %p422
      $region82: #{transformer_forward.2} parent=71 // pred_check_branch
        %1179 = sbr.rel (%p1177) target = $region84
      $region83: #{transformer_forward.2} parent=71 // pred_region
        _
      $region84: #{transformer_forward.2} parent=71 // pred_fallthru
        _
    $region72: #{transformer_forward.2} parent=5 // pred_fallthru
      _
    %p1180 = scmp.le.s32.totalorder 2, %s21
    // Predicated region
    $region85: #{transformer_forward.2} parent=5 // pred_check
      %p1181 = pneg %p1180
    $region86: #{transformer_forward.2} parent=5 // pred_check_branch
      %1183 = sbr.rel (%p1181) target = $region88
    $region87: #{transformer_forward.2} parent=5 // pred_region
      %s1184 = ssub.s32 %s21, 2
      // Predicated region
      $region89: #{transformer_forward.2} parent=87 // pred_check
        %p1185 = pneg %p402
      $region90: #{transformer_forward.2} parent=87 // pred_check_branch
        %1187 = sbr.rel (%p1185) target = $region92
      $region91: #{transformer_forward.2} parent=87 // pred_region
        %p1188 = scmp.lt.s32.totalorder %s33, 1
        %s1189 = scalar_select %p1188, %s33, 1
        %p1190 = scmp.lt.s32.totalorder %s32, 1
        %s1191 = scalar_select %p1190, %s32, 1
        %s1192 = smul.addr %s1189, 2
        %s1193 = sadd.s32 %s1191, %s1192
        %s1194 = smul.addr %s1193, 8
        %s1195 = scalar_lea.vmem %s13, %s1194
      $region92: #{transformer_forward.2} parent=87 // pred_fallthru
        _
      // Predicated region
      $region93: #{transformer_forward.2} parent=87 // pred_check
        %p1196 = pneg %p428
      $region94: #{transformer_forward.2} parent=87 // pred_check_branch
        %1198 = sbr.rel (%p1196) target = $region96
      $region95: #{transformer_forward.2} parent=87 // pred_region
        %p1199 = scmp.lt.s32.totalorder %s32, 1
        %s1200 = scalar_select %p1199, %s32, 1
        %s1201 = smul.addr %s1200, 8
        %s1202 = scalar_lea.vmem %s14, %s1201
      $region96: #{transformer_forward.2} parent=87 // pred_fallthru
        _
    $region88: #{transformer_forward.2} parent=5 // pred_fallthru
      _
  $region6: #{transformer_forward.2} parent=0 // loop_footer
    %s25 = sadd.s32 1, %s21
  $region7: #{transformer_forward.2} parent=0 // loop_footer_branch
    %20 = sbr.rel target = $region3
  $region8: #{transformer_forward.2} parent=0 // loop_exit
    _

</llo_original>
